<compile_context>
chip_gen: v7x
topology: tpu7x:2x2x1
jax: 0.10.0
libtpu: 0.0.40
codegen_flags: <defaults>
</compile_context>

<pallas_src>
import jax
import jax.numpy as jnp
from jax.experimental import pallas as pl
from jax.experimental.pallas import tpu as pltpu


def _round_up(x, m):
    return (x + m - 1) // m * m


def _pick_tile(n, block_m):
    """Batch tile: multiple of 16 (8 as fallback), never larger than n, and
    split into >=2 grid steps for large batches (v7x megacore)."""
    tm = min(block_m, n)
    if tm >= 16:
        tm = (tm // 16) * 16
    elif tm >= 8:
        tm = 8
    # else tm == n < 8 (block row equals the full array dim, which is legal)
    if n >= 256 and pl.cdiv(n, tm) < 2:
        tm = max(16, ((n // 2) // 16) * 16)
    return tm


# ---------------------------------------------------------------------------
# Kernel bodies
# ---------------------------------------------------------------------------

def _resnet_body(x, w_in_ref, w_blk_ref, w_out_ref, bias_ref):
    """FC-resnet forward on an in-VMEM activation tile.

    x: (tm, k_in) f32.  Weights are bf16 refs; bias_ref is (8, hidden) f32
    with row 0 = b_in, 1 = b_b1, 2 = b_b2, 3[:head_w] = b_out.
    Returns (tm, head_w) f32 where head_w = w_out.shape[1].
    """
    def mm(a, w):
        # bf16 MXU operands, f32 accumulation; elementwise math stays f32.
        return jnp.dot(a.astype(jnp.bfloat16), w, preferred_element_type=jnp.float32)

    head_w = w_out_ref.shape[1]
    h = jnp.maximum(mm(x, w_in_ref[...]) + bias_ref[0:1, :], 0.0)
    r = h
    h = jnp.maximum(mm(h, w_blk_ref[0]) + bias_ref[1:2, :], 0.0)
    h = jnp.maximum(mm(h, w_blk_ref[1]) + bias_ref[2:3, :], 0.0)
    h = h + r
    return mm(h, w_out_ref[...]) + bias_ref[3:4, :head_w]


def _make_resnet_kernel(in_size, k_in, out_size):
    needs_pad = in_size != k_in

    def kernel(x_ref, w_in_ref, w_blk_ref, w_out_ref, bias_ref, o_ref, pad_ref=None):
        if needs_pad:
            # Zero-pad the input tile to the weight's K inside VMEM (no HBM
            # padding copy).  Re-zeroed every step: no cross-step state, so the
            # batch axis stays safely "parallel" for megacore sharding.
            pad_ref[...] = jnp.zeros_like(pad_ref)
            pad_ref[:, :in_size] = x_ref[...]
            x = pad_ref[...]
        else:
            x = x_ref[...]
        out = _resnet_body(x, w_in_ref, w_blk_ref, w_out_ref, bias_ref)
        o_ref[...] = out[:, :out_size].astype(o_ref.dtype)

    return kernel


def _make_gan_fused_kernel(latent_size, k_lat, data_size):
    def kernel(z_ref, gw_in, gw_blk, gw_out, gb,
               dw_in, dw_blk, dw_out, db,
               fake_ref, score_ref, zpad_ref):
        # Pad the (tm, latent_size) tile to the generator weight's K in VMEM.
        zpad_ref[...] = jnp.zeros_like(zpad_ref)
        zpad_ref[:, :latent_size] = z_ref[...]
        # Generator: latent tile -> fake samples (kept in VMEM, written bf16).
        fake = _resnet_body(zpad_ref[...], gw_in, gw_blk, gw_out, gb)
        fake_ref[...] = fake[:, :data_size].astype(fake_ref.dtype)
        # Discriminator consumes the in-VMEM f32 fake directly (same bf16 MXU
        # rounding as reloading a bf16 store; no HBM round trip).
        score = _resnet_body(fake, dw_in, dw_blk, dw_out, db)
        score_ref[...] = score[:, :1].astype(score_ref.dtype)

    return kernel


# ---------------------------------------------------------------------------
# Wrappers
# ---------------------------------------------------------------------------

def _weight_specs(p):
    """Weight/bias BlockSpecs with constant index_map (VMEM-resident across grid)."""
    return [
        pl.BlockSpec(p["w_in"].shape, lambda i: (0, 0)),
        pl.BlockSpec(p["w_blocks"].shape, lambda i: (0, 0, 0)),
        pl.BlockSpec(p["w_out"].shape, lambda i: (0, 0)),
        pl.BlockSpec(p["bias"].shape, lambda i: (0, 0)),
    ]


def _weight_args(p):
    return (p["w_in"], p["w_blocks"], p["w_out"], p["bias"])


def fc_resnet_forward(x, params, *, block_m=512, out_dtype=jnp.float32):
    """x: (n, in_size). Returns (n, out_size). Single standalone pallas_call."""
    n = x.shape[0]
    in_size, out_size = params["in_size"], params["out_size"]
    k_in = params["w_in"].shape[0]
    assert x.shape[1] == in_size
    tm = _pick_tile(n, block_m)
    needs_pad = in_size != k_in
    scratch = [pltpu.VMEM((tm, k_in), jnp.float32)] if needs_pad else []

    x = x.astype(jnp.float32)
    return pl.pallas_call(
        _make_resnet_kernel(in_size, k_in, out_size),
        out_shape=jax.ShapeDtypeStruct((n, out_size), out_dtype),
        grid_spec=pltpu.PrefetchScalarGridSpec(
            num_scalar_prefetch=0,
            grid=(pl.cdiv(n, tm),),
            in_specs=[pl.BlockSpec((tm, in_size), lambda i: (i, 0))]
                     + _weight_specs(params),
            out_specs=pl.BlockSpec((tm, out_size), lambda i: (i, 0)),
            scratch_shapes=scratch,
        ),
        compiler_params=pltpu.CompilerParams(
            dimension_semantics=("parallel",)),
    )(x, *_weight_args(params))


def gan_sample_and_score(latents, gen_params, discr_params, *, block_m=512):
    """Fused generator -> discriminator in one pallas_call.

    Returns (fake bf16 (n, data_size), scores f32 (n, 1)).
    """
    n = latents.shape[0]
    latent_size = gen_params["in_size"]
    data_size = gen_params["out_size"]
    k_lat = gen_params["w_in"].shape[0]
    assert latents.shape[1] == latent_size
    assert gen_params["w_out"].shape[1] == discr_params["w_in"].shape[0], \
        "fused path: generator head width must equal discriminator input K"

    tm = _pick_tile(n, block_m)
    z = latents.astype(jnp.float32)

    fake, scores = pl.pallas_call(
        _make_gan_fused_kernel(latent_size, k_lat, data_size),
        out_shape=(jax.ShapeDtypeStruct((n, data_size), jnp.bfloat16),
                   jax.ShapeDtypeStruct((n, 1), jnp.float32)),
        grid_spec=pltpu.PrefetchScalarGridSpec(
            num_scalar_prefetch=0,
            grid=(pl.cdiv(n, tm),),
            in_specs=[pl.BlockSpec((tm, latent_size), lambda i: (i, 0))]
                     + _weight_specs(gen_params)
                     + _weight_specs(discr_params),
            out_specs=[pl.BlockSpec((tm, data_size), lambda i: (i, 0)),
                       pl.BlockSpec((tm, 1), lambda i: (i, 0))],
            scratch_shapes=[pltpu.VMEM((tm, k_lat), jnp.float32)],
        ),
        compiler_params=pltpu.CompilerParams(
            dimension_semantics=("parallel",)),
    )(z, *_weight_args(gen_params), *_weight_args(discr_params))
    return fake, scores


# ---------------------------------------------------------------------------
# Parameter init (bf16 weights padded to 16-multiples, f32 packed biases)
# ---------------------------------------------------------------------------

def init_fc_resnet(key, in_size, hidden_size, out_size, scale=0.05):
    k_in = _round_up(max(in_size, 1), 16)      # bf16 sublane pack
    head_w = _round_up(max(out_size, 1), 16)
    assert head_w <= hidden_size, "b_out packing assumes head_w <= hidden"
    ks = jax.random.split(key, 8)

    w_in = jnp.zeros((k_in, hidden_size), jnp.float32).at[:in_size, :].set(
        scale * jax.random.normal(ks[0], (in_size, hidden_size), jnp.float32))
    w_b1 = scale * jax.random.normal(ks[1], (hidden_size, hidden_size), jnp.float32)
    w_b2 = scale * jax.random.normal(ks[2], (hidden_size, hidden_size), jnp.float32)
    w_out = jnp.zeros((hidden_size, head_w), jnp.float32).at[:, :out_size].set(
        scale * jax.random.normal(ks[3], (hidden_size, out_size), jnp.float32))

    bias = jnp.zeros((8, hidden_size), jnp.float32)
    bias = bias.at[0].set(scale * jax.random.normal(ks[4], (hidden_size,), jnp.float32))
    bias = bias.at[1].set(scale * jax.random.normal(ks[5], (hidden_size,), jnp.float32))
    bias = bias.at[2].set(scale * jax.random.normal(ks[6], (hidden_size,), jnp.float32))
    bias = bias.at[3, :out_size].set(
        scale * jax.random.normal(ks[7], (out_size,), jnp.float32))

    return {
        "w_in": w_in.astype(jnp.bfloat16),                          # (k_in, H)
        "w_blocks": jnp.stack([w_b1, w_b2]).astype(jnp.bfloat16),   # (2, H, H)
        "w_out": w_out.astype(jnp.bfloat16),                        # (H, head_w)
        "bias": bias,                                               # (8, H) f32
        "in_size": in_size,
        "out_size": out_size,
    }


class FullyConnectedGanPallas:
    """Pallas port of FullyConnectedGan's forward paths (WGAN, FC nets)."""

    def __init__(self, key, data_size=48, latent_size=10, hidden_size=256,
                 clip_max=0.01):
        self.model_name = "fully_connected_gan"
        self.data_size = data_size
        self.latent_size = latent_size
        # TODO(synk): WGAN weight clipping / gradient penalty are training-time
        # ops, not part of the forward pass; clip_max is stored but unused.
        self.clip_max = clip_max
        k_d, k_g = jax.random.split(key)
        self.discr_params = init_fc_resnet(k_d, data_size, hidden_size, 1)
        self.gen_params = init_fc_resnet(k_g, latent_size, hidden_size, data_size)

    def generator(self, latents):
        return fc_resnet_forward(latents, self.gen_params)

    def discriminator(self, x):
        return fc_resnet_forward(x, self.discr_params)

    def sample(self, key, n):
        latents = jax.random.uniform(key, (n, self.latent_size), jnp.float32,
                                     minval=-1.0, maxval=1.0)
        return self.generator(latents)

    def sample_and_score(self, latents):
        """Fused generator+discriminator: one launch, fake stays in VMEM."""
        return gan_sample_and_score(latents, self.gen_params, self.discr_params)


# ---------------------------------------------------------------------------
# Pure-JAX reference (same bf16-matmul / f32-accumulate math)
# ---------------------------------------------------------------------------

def _jax_reference(x, p):
    k_in = p["w_in"].shape[0]
    head_w = p["w_out"].shape[1]
    xp = jnp.zeros((x.shape[0], k_in), jnp.float32).at[:, :p["in_size"]].set(
        x.astype(jnp.float32))

    def mm(a, w):
        return jnp.dot(a.astype(jnp.bfloat16), w, preferred_element_type=jnp.float32)

    b = p["bias"]
    h = jnp.maximum(mm(xp, p["w_in"]) + b[0], 0.0)
    r = h
    h = jnp.maximum(mm(h, p["w_blocks"][0]) + b[1], 0.0)
    h = jnp.maximum(mm(h, p["w_blocks"][1]) + b[2], 0.0)
    h = h + r
    o = mm(h, p["w_out"]) + b[3, :head_w]
    return o[:, :p["out_size"]]


if __name__ == "__main__":
    key = jax.random.PRNGKey(0)
    k_model, k_lat, k_rag = jax.random.split(key, 3)

    gan = FullyConnectedGanPallas(k_model, data_size=48, latent_size=10,
                                  hidden_size=256)

    n = 64
    latents = jax.random.uniform(k_lat, (n, gan.latent_size), jnp.float32,
                                 minval=-1.0, maxval=1.0)

    # Fused single-launch path: generator -> discriminator, no HBM round trip.
    fake, scores = gan.sample_and_score(latents)
    fake = jax.block_until_ready(fake)
    scores = jax.block_until_ready(scores)
    assert fake.shape == (n, 48) and fake.dtype == jnp.bfloat16
    assert scores.shape == (n, 1)

    # Standalone kernels (generator, then discriminator) must agree with fused.
    fake_sep = jax.block_until_ready(gan.generator(latents))        # f32
    scores_sep = jax.block_until_ready(gan.discriminator(fake_sep))
    assert fake_sep.shape == (n, 48) and scores_sep.shape == (n, 1)
    assert jnp.allclose(fake.astype(jnp.float32), fake_sep, atol=1e-2, rtol=1e-2)
    assert jnp.allclose(scores, scores_sep, atol=2e-3, rtol=1e-2)

    # Correctness vs pure-JAX reference using identical bf16/f32 math.
    fake_ref = _jax_reference(latents, gan.gen_params)
    scores_ref = _jax_reference(fake_ref, gan.discr_params)
    assert jnp.allclose(fake_sep, fake_ref, atol=1e-3, rtol=1e-3)
    assert jnp.allclose(scores_sep, scores_ref, atol=2e-3, rtol=1e-2)

    # Ragged batch (n not a multiple of the tile): exercises clipped last block.
    x_rag = jax.random.normal(k_rag, (20, gan.data_size), jnp.float32) * 0.1
    s_rag = jax.block_until_ready(gan.discriminator(x_rag))
    s_rag_ref = _jax_reference(x_rag, gan.discr_params)
    assert s_rag.shape == (20, 1)
    assert jnp.allclose(s_rag, s_rag_ref, atol=2e-3, rtol=1e-2)

    print("KERNEL_OK")
</pallas_src>

<mosaic_0001>
module attributes {stable_mosaic.version = 11 : i64} {
  func.func @kernel(%arg0: i32, %arg1: memref<64x10xf32, #tpu.memory_space<vmem>>, %arg2: memref<16x256xbf16, #tpu.memory_space<vmem>>, %arg3: memref<2x256x256xbf16, #tpu.memory_space<vmem>>, %arg4: memref<256x48xbf16, #tpu.memory_space<vmem>>, %arg5: memref<8x256xf32, #tpu.memory_space<vmem>>, %arg6: memref<48x256xbf16, #tpu.memory_space<vmem>>, %arg7: memref<2x256x256xbf16, #tpu.memory_space<vmem>>, %arg8: memref<256x16xbf16, #tpu.memory_space<vmem>>, %arg9: memref<8x256xf32, #tpu.memory_space<vmem>>, %arg10: memref<64x48xbf16, #tpu.memory_space<vmem>>, %arg11: memref<64x1xf32, #tpu.memory_space<vmem>>, %arg12: memref<64x16xf32, #tpu.memory_space<vmem>>) attributes {dimension_semantics = [#tpu.dimension_semantics<parallel>], iteration_bounds = array<i64: 1>, scalar_prefetch = 0 : i64, scratch_operands = 1 : i64, tpu.core_type = #tpu.core_type<tc>, window_params = [{transform_indices = @transform_0, window_bounds = array<i64: 64, 10>}, {pipeline_mode = #tpu.pipeline_mode<synchronous>, transform_indices = @transform_1, window_bounds = array<i64: 16, 256>}, {pipeline_mode = #tpu.pipeline_mode<synchronous>, transform_indices = @transform_2, window_bounds = array<i64: 2, 256, 256>}, {pipeline_mode = #tpu.pipeline_mode<synchronous>, transform_indices = @transform_3, window_bounds = array<i64: 256, 48>}, {pipeline_mode = #tpu.pipeline_mode<synchronous>, transform_indices = @transform_4, window_bounds = array<i64: 8, 256>}, {pipeline_mode = #tpu.pipeline_mode<synchronous>, transform_indices = @transform_5, window_bounds = array<i64: 48, 256>}, {pipeline_mode = #tpu.pipeline_mode<synchronous>, transform_indices = @transform_6, window_bounds = array<i64: 2, 256, 256>}, {pipeline_mode = #tpu.pipeline_mode<synchronous>, transform_indices = @transform_7, window_bounds = array<i64: 256, 16>}, {pipeline_mode = #tpu.pipeline_mode<synchronous>, transform_indices = @transform_8, window_bounds = array<i64: 8, 256>}, {transform_indices = @transform_9, window_bounds = array<i64: 64, 48>}, {transform_indices = @transform_10, window_bounds = array<i64: 64, 1>}]} {
    %cst = arith.constant 0.000000e+00 : f32
    %0 = vector.broadcast %cst : f32 to vector<64x16xf32>
    %c0 = arith.constant 0 : index
    %c0_0 = arith.constant 0 : index
    %1 = vector.load %arg12[%c0, %c0_0] : memref<64x16xf32, #tpu.memory_space<vmem>>, vector<64x16xf32>
    tpu.vector_store %arg12[%c0, %c0_0], %0 {strides = array<i32>} : memref<64x16xf32, #tpu.memory_space<vmem>>, vector<64x16xf32>,
    %c0_1 = arith.constant 0 : index
    %c0_2 = arith.constant 0 : index
    %2 = vector.load %arg1[%c0_1, %c0_2] : memref<64x10xf32, #tpu.memory_space<vmem>>, vector<64x10xf32>
    %c0_3 = arith.constant 0 : index
    %c0_4 = arith.constant 0 : index
    %3 = vector.load %arg12[%c0_3, %c0_4] : memref<64x16xf32, #tpu.memory_space<vmem>>, vector<64x10xf32>
    tpu.vector_store %arg12[%c0_3, %c0_4], %2 {strides = array<i32>} : memref<64x16xf32, #tpu.memory_space<vmem>>, vector<64x10xf32>,
    %c0_5 = arith.constant 0 : index
    %c0_6 = arith.constant 0 : index
    %4 = vector.load %arg12[%c0_5, %c0_6] : memref<64x16xf32, #tpu.memory_space<vmem>>, vector<64x16xf32>
    %c0_7 = arith.constant 0 : index
    %c0_8 = arith.constant 0 : index
    %5 = vector.load %arg2[%c0_7, %c0_8] : memref<16x256xbf16, #tpu.memory_space<vmem>>, vector<16x256xbf16>
    %6 = arith.truncf %4 : vector<64x16xf32> to vector<64x16xbf16>
    %cst_9 = arith.constant dense<0.000000e+00> : vector<64x256xf32>
    %7 = tpu.matmul %6, %5, %cst_9 {dimension_numbers = #tpu.dot_dimension_numbers<[1], [0], [0], [1], [0, 0, 1, 1], [], []>} : vector<64x16xbf16>, vector<16x256xbf16>, vector<64x256xf32> -> vector<64x256xf32>
    %c0_10 = arith.constant 0 : index
    %c0_11 = arith.constant 0 : index
    %8 = vector.load %arg5[%c0_10, %c0_11] : memref<8x256xf32, #tpu.memory_space<vmem>>, vector<1x256xf32>
    %9 = vector.broadcast %8 : vector<1x256xf32> to vector<64x256xf32>
    %10 = arith.addf %7, %9 : vector<64x256xf32>
    %cst_12 = arith.constant 0.000000e+00 : f32
    %11 = vector.broadcast %cst_12 : f32 to vector<64x256xf32>
    %12 = arith.maximumf %10, %11 : vector<64x256xf32>
    %c0_13 = arith.constant 0 : index
    %c0_14 = arith.constant 0 : index
    %c0_15 = arith.constant 0 : index
    %13 = vector.load %arg3[%c0_13, %c0_14, %c0_15] : memref<2x256x256xbf16, #tpu.memory_space<vmem>>, vector<1x256x256xbf16>
    %14 = vector.shape_cast %13 : vector<1x256x256xbf16> to vector<256x256xbf16>
    %15 = arith.truncf %12 : vector<64x256xf32> to vector<64x256xbf16>
    %cst_16 = arith.constant dense<0.000000e+00> : vector<64x256xf32>
    %16 = tpu.matmul %15, %14, %cst_16 {dimension_numbers = #tpu.dot_dimension_numbers<[1], [0], [0], [1], [0, 0, 1, 1], [], []>} : vector<64x256xbf16>, vector<256x256xbf16>, vector<64x256xf32> -> vector<64x256xf32>
    %c1 = arith.constant 1 : index
    %c0_17 = arith.constant 0 : index
    %17 = vector.load %arg5[%c1, %c0_17] : memref<8x256xf32, #tpu.memory_space<vmem>>, vector<1x256xf32>
    %18 = vector.broadcast %17 : vector<1x256xf32> to vector<64x256xf32>
    %19 = arith.addf %16, %18 : vector<64x256xf32>
    %cst_18 = arith.constant 0.000000e+00 : f32
    %20 = vector.broadcast %cst_18 : f32 to vector<64x256xf32>
    %21 = arith.maximumf %19, %20 : vector<64x256xf32>
    %c1_19 = arith.constant 1 : index
    %c0_20 = arith.constant 0 : index
    %c0_21 = arith.constant 0 : index
    %22 = vector.load %arg3[%c1_19, %c0_20, %c0_21] : memref<2x256x256xbf16, #tpu.memory_space<vmem>>, vector<1x256x256xbf16>
    %23 = vector.shape_cast %22 : vector<1x256x256xbf16> to vector<256x256xbf16>
    %24 = arith.truncf %21 : vector<64x256xf32> to vector<64x256xbf16>
    %cst_22 = arith.constant dense<0.000000e+00> : vector<64x256xf32>
    %25 = tpu.matmul %24, %23, %cst_22 {dimension_numbers = #tpu.dot_dimension_numbers<[1], [0], [0], [1], [0, 0, 1, 1], [], []>} : vector<64x256xbf16>, vector<256x256xbf16>, vector<64x256xf32> -> vector<64x256xf32>
    %c2 = arith.constant 2 : index
    %c0_23 = arith.constant 0 : index
    %26 = vector.load %arg5[%c2, %c0_23] : memref<8x256xf32, #tpu.memory_space<vmem>>, vector<1x256xf32>
    %27 = vector.broadcast %26 : vector<1x256xf32> to vector<64x256xf32>
    %28 = arith.addf %25, %27 : vector<64x256xf32>
    %cst_24 = arith.constant 0.000000e+00 : f32
    %29 = vector.broadcast %cst_24 : f32 to vector<64x256xf32>
    %30 = arith.maximumf %28, %29 : vector<64x256xf32>
    %31 = arith.addf %30, %12 : vector<64x256xf32>
    %c0_25 = arith.constant 0 : index
    %c0_26 = arith.constant 0 : index
    %32 = vector.load %arg4[%c0_25, %c0_26] : memref<256x48xbf16, #tpu.memory_space<vmem>>, vector<256x48xbf16>
    %33 = arith.truncf %31 : vector<64x256xf32> to vector<64x256xbf16>
    %cst_27 = arith.constant dense<0.000000e+00> : vector<64x48xf32>
    %34 = tpu.matmul %33, %32, %cst_27 {dimension_numbers = #tpu.dot_dimension_numbers<[1], [0], [0], [1], [0, 0, 1, 1], [], []>} : vector<64x256xbf16>, vector<256x48xbf16>, vector<64x48xf32> -> vector<64x48xf32>
    %c3 = arith.constant 3 : index
    %c0_28 = arith.constant 0 : index
    %35 = vector.load %arg5[%c3, %c0_28] : memref<8x256xf32, #tpu.memory_space<vmem>>, vector<1x48xf32>
    %36 = vector.broadcast %35 : vector<1x48xf32> to vector<64x48xf32>
    %37 = arith.addf %34, %36 : vector<64x48xf32>
    %38 = arith.truncf %37 : vector<64x48xf32> to vector<64x48xbf16>
    %c0_29 = arith.constant 0 : index
    %c0_30 = arith.constant 0 : index
    %39 = vector.load %arg10[%c0_29, %c0_30] : memref<64x48xbf16, #tpu.memory_space<vmem>>, vector<64x48xbf16>
    tpu.vector_store %arg10[%c0_29, %c0_30], %38 {strides = array<i32>} : memref<64x48xbf16, #tpu.memory_space<vmem>>, vector<64x48xbf16>,
    %c0_31 = arith.constant 0 : index
    %c0_32 = arith.constant 0 : index
    %40 = vector.load %arg6[%c0_31, %c0_32] : memref<48x256xbf16, #tpu.memory_space<vmem>>, vector<48x256xbf16>
    %41 = arith.truncf %37 : vector<64x48xf32> to vector<64x48xbf16>
    %cst_33 = arith.constant dense<0.000000e+00> : vector<64x256xf32>
    %42 = tpu.matmul %41, %40, %cst_33 {dimension_numbers = #tpu.dot_dimension_numbers<[1], [0], [0], [1], [0, 0, 1, 1], [], []>} : vector<64x48xbf16>, vector<48x256xbf16>, vector<64x256xf32> -> vector<64x256xf32>
    %c0_34 = arith.constant 0 : index
    %c0_35 = arith.constant 0 : index
    %43 = vector.load %arg9[%c0_34, %c0_35] : memref<8x256xf32, #tpu.memory_space<vmem>>, vector<1x256xf32>
    %44 = vector.broadcast %43 : vector<1x256xf32> to vector<64x256xf32>
    %45 = arith.addf %42, %44 : vector<64x256xf32>
    %cst_36 = arith.constant 0.000000e+00 : f32
    %46 = vector.broadcast %cst_36 : f32 to vector<64x256xf32>
    %47 = arith.maximumf %45, %46 : vector<64x256xf32>
    %c0_37 = arith.constant 0 : index
    %c0_38 = arith.constant 0 : index
    %c0_39 = arith.constant 0 : index
    %48 = vector.load %arg7[%c0_37, %c0_38, %c0_39] : memref<2x256x256xbf16, #tpu.memory_space<vmem>>, vector<1x256x256xbf16>
    %49 = vector.shape_cast %48 : vector<1x256x256xbf16> to vector<256x256xbf16>
    %50 = arith.truncf %47 : vector<64x256xf32> to vector<64x256xbf16>
    %cst_40 = arith.constant dense<0.000000e+00> : vector<64x256xf32>
    %51 = tpu.matmul %50, %49, %cst_40 {dimension_numbers = #tpu.dot_dimension_numbers<[1], [0], [0], [1], [0, 0, 1, 1], [], []>} : vector<64x256xbf16>, vector<256x256xbf16>, vector<64x256xf32> -> vector<64x256xf32>
    %c1_41 = arith.constant 1 : index
    %c0_42 = arith.constant 0 : index
    %52 = vector.load %arg9[%c1_41, %c0_42] : memref<8x256xf32, #tpu.memory_space<vmem>>, vector<1x256xf32>
    %53 = vector.broadcast %52 : vector<1x256xf32> to vector<64x256xf32>
    %54 = arith.addf %51, %53 : vector<64x256xf32>
    %cst_43 = arith.constant 0.000000e+00 : f32
    %55 = vector.broadcast %cst_43 : f32 to vector<64x256xf32>
    %56 = arith.maximumf %54, %55 : vector<64x256xf32>
    %c1_44 = arith.constant 1 : index
    %c0_45 = arith.constant 0 : index
    %c0_46 = arith.constant 0 : index
    %57 = vector.load %arg7[%c1_44, %c0_45, %c0_46] : memref<2x256x256xbf16, #tpu.memory_space<vmem>>, vector<1x256x256xbf16>
    %58 = vector.shape_cast %57 : vector<1x256x256xbf16> to vector<256x256xbf16>
    %59 = arith.truncf %56 : vector<64x256xf32> to vector<64x256xbf16>
    %cst_47 = arith.constant dense<0.000000e+00> : vector<64x256xf32>
    %60 = tpu.matmul %59, %58, %cst_47 {dimension_numbers = #tpu.dot_dimension_numbers<[1], [0], [0], [1], [0, 0, 1, 1], [], []>} : vector<64x256xbf16>, vector<256x256xbf16>, vector<64x256xf32> -> vector<64x256xf32>
    %c2_48 = arith.constant 2 : index
    %c0_49 = arith.constant 0 : index
    %61 = vector.load %arg9[%c2_48, %c0_49] : memref<8x256xf32, #tpu.memory_space<vmem>>, vector<1x256xf32>
    %62 = vector.broadcast %61 : vector<1x256xf32> to vector<64x256xf32>
    %63 = arith.addf %60, %62 : vector<64x256xf32>
    %cst_50 = arith.constant 0.000000e+00 : f32
    %64 = vector.broadcast %cst_50 : f32 to vector<64x256xf32>
    %65 = arith.maximumf %63, %64 : vector<64x256xf32>
    %66 = arith.addf %65, %47 : vector<64x256xf32>
    %c0_51 = arith.constant 0 : index
    %c0_52 = arith.constant 0 : index
    %67 = vector.load %arg8[%c0_51, %c0_52] : memref<256x16xbf16, #tpu.memory_space<vmem>>, vector<256x16xbf16>
    %68 = arith.truncf %66 : vector<64x256xf32> to vector<64x256xbf16>
    %cst_53 = arith.constant dense<0.000000e+00> : vector<64x16xf32>
    %69 = tpu.matmul %68, %67, %cst_53 {dimension_numbers = #tpu.dot_dimension_numbers<[1], [0], [0], [1], [0, 0, 1, 1], [], []>} : vector<64x256xbf16>, vector<256x16xbf16>, vector<64x16xf32> -> vector<64x16xf32>
    %c3_54 = arith.constant 3 : index
    %c0_55 = arith.constant 0 : index
    %70 = vector.load %arg9[%c3_54, %c0_55] : memref<8x256xf32, #tpu.memory_space<vmem>>, vector<1x16xf32>
    %71 = vector.broadcast %70 : vector<1x16xf32> to vector<64x16xf32>
    %72 = arith.addf %69, %71 : vector<64x16xf32>
    %73 = vector.extract_strided_slice %72 {offsets = [0, 0], sizes = [64, 1], strides = [1, 1]} : vector<64x16xf32> to vector<64x1xf32>
    %c0_56 = arith.constant 0 : index
    %c0_57 = arith.constant 0 : index
    %74 = vector.load %arg11[%c0_56, %c0_57] : memref<64x1xf32, #tpu.memory_space<vmem>>, vector<64x1xf32>
    tpu.vector_store %arg11[%c0_56, %c0_57], %73 {strides = array<i32>} : memref<64x1xf32, #tpu.memory_space<vmem>>, vector<64x1xf32>,
    return
  }
  func.func @transform_0(%arg0: i32) -> (i32, i32) {
    %c0_i32 = arith.constant 0 : i32
    %c0_i32_0 = arith.constant 0 : i32
    return %arg0, %c0_i32 : i32, i32
  }
  func.func @transform_1(%arg0: i32) -> (i32, i32) {
    %c0_i32 = arith.constant 0 : i32
    %c0_i32_0 = arith.constant 0 : i32
    %c0_i32_1 = arith.constant 0 : i32
    return %c0_i32, %c0_i32_0 : i32, i32
  }
  func.func @transform_2(%arg0: i32) -> (i32, i32, i32) {
    %c0_i32 = arith.constant 0 : i32
    %c0_i32_0 = arith.constant 0 : i32
    %c0_i32_1 = arith.constant 0 : i32
    %c0_i32_2 = arith.constant 0 : i32
    return %c0_i32, %c0_i32_0, %c0_i32_1 : i32, i32, i32
  }
  func.func @transform_3(%arg0: i32) -> (i32, i32) {
    %c0_i32 = arith.constant 0 : i32
    %c0_i32_0 = arith.constant 0 : i32
    %c0_i32_1 = arith.constant 0 : i32
    return %c0_i32, %c0_i32_0 : i32, i32
  }
  func.func @transform_4(%arg0: i32) -> (i32, i32) {
    %c0_i32 = arith.constant 0 : i32
    %c0_i32_0 = arith.constant 0 : i32
    %c0_i32_1 = arith.constant 0 : i32
    return %c0_i32, %c0_i32_0 : i32, i32
  }
  func.func @transform_5(%arg0: i32) -> (i32, i32) {
    %c0_i32 = arith.constant 0 : i32
    %c0_i32_0 = arith.constant 0 : i32
    %c0_i32_1 = arith.constant 0 : i32
    return %c0_i32, %c0_i32_0 : i32, i32
  }
  func.func @transform_6(%arg0: i32) -> (i32, i32, i32) {
    %c0_i32 = arith.constant 0 : i32
    %c0_i32_0 = arith.constant 0 : i32
    %c0_i32_1 = arith.constant 0 : i32
    %c0_i32_2 = arith.constant 0 : i32
    return %c0_i32, %c0_i32_0, %c0_i32_1 : i32, i32, i32
  }
  func.func @transform_7(%arg0: i32) -> (i32, i32) {
    %c0_i32 = arith.constant 0 : i32
    %c0_i32_0 = arith.constant 0 : i32
    %c0_i32_1 = arith.constant 0 : i32
    return %c0_i32, %c0_i32_0 : i32, i32
  }
  func.func @transform_8(%arg0: i32) -> (i32, i32) {
    %c0_i32 = arith.constant 0 : i32
    %c0_i32_0 = arith.constant 0 : i32
    %c0_i32_1 = arith.constant 0 : i32
    return %c0_i32, %c0_i32_0 : i32, i32
  }
  func.func @transform_9(%arg0: i32) -> (i32, i32) {
    %c0_i32 = arith.constant 0 : i32
    %c0_i32_0 = arith.constant 0 : i32
    return %arg0, %c0_i32 : i32, i32
  }
  func.func @transform_10(%arg0: i32) -> (i32, i32) {
    %c0_i32 = arith.constant 0 : i32
    %c0_i32_0 = arith.constant 0 : i32
    return %arg0, %c0_i32 : i32, i32
  }
}

</mosaic_0001>

<llo_original>
// kernel: tpu_custom_call.1
$region0: #{tpu_custom_call.1}
  #allocation0 [shape = 'u32[]', space=smem, size = 0x4, offset = 0x4, fixed_abs, tag = 'smem constant byte address 0x4 - core index']
  #allocation1 [shape = 'u32[144,128]{1,0:T(1,128)}', space=vmem, size = 0x12000, scoped, tag = 'internal scratch']
  #allocation2 [shape = 'f32[64,16]{1,0:T(8,128)}', space=vmem, size = 0x8000, scoped, tag = 'scratch operand']
  %s0 = inlined_call_operand.vmem [shape: f32[64,10], index: 0, kind: input, shape index: {}]
  %s1 = inlined_call_operand.vmem [shape: bf16[16,256], index: 1, kind: input, shape index: {}]
  %s2 = inlined_call_operand.hbm [shape: bf16[2,256,256], index: 2, kind: input, shape index: {}]
  %s3 = inlined_call_operand.vmem [shape: bf16[256,48], index: 3, kind: input, shape index: {}]
  %s4 = inlined_call_operand.vmem [shape: f32[8,256], index: 4, kind: input, shape index: {}]
  %s5 = inlined_call_operand.vmem [shape: bf16[48,256], index: 5, kind: input, shape index: {}]
  %s6 = inlined_call_operand.hbm [shape: bf16[2,256,256], index: 6, kind: input, shape index: {}]
  %s7 = inlined_call_operand.vmem [shape: bf16[256,16], index: 7, kind: input, shape index: {}]
  %s8 = inlined_call_operand.vmem [shape: f32[8,256], index: 8, kind: input, shape index: {}]
  %s9 = inlined_call_operand.vmem [shape: bf16[64,48], index: 9, kind: output, shape index: {0}]
  %s10 = inlined_call_operand.vmem [shape: f32[64,1], index: 10, kind: output, shape index: {1}]
  %11 = xla_tuple %s9, %s10
  %s12 = sld [smem:[#allocation0]]
  $region62: #{tpu_custom_call.1} parent=0
    _
  %s14 = ssub.s32 1, %s12
  %s15 = scalar_select 0, %s14, %s12
  $region1: #{tpu_custom_call.1} parent=0
    #allocation3 [shape = 'u8[262144]{0}', space=vmem, size = 0x40000, scoped, tag = 'input window, operand 2, single buffered']
    #allocation4 [shape = 's32[1]{0}', space=sflag, size = 0x4, scoped, tag = 'scoped memory for tpu_custom_call.1']
    #allocation5 [shape = 'u8[262144]{0}', space=vmem, size = 0x40000, scoped, tag = 'input window, operand 6, single buffered']
    #allocation6 [shape = 's32[1]{0}', space=sflag, size = 0x4, scoped, tag = 'scoped memory for tpu_custom_call.1']
    %16 = vsyncpa [#allocation4], 0
    %17 = vsyncpa [#allocation6], 0
    // Predicated region
    $region2: #{tpu_custom_call.1} parent=1 // pred_check
      _
    $region3: #{tpu_custom_call.1} parent=1 // pred_check_branch
      %19 = sbr.rel (0) target = $region5
    $region4: #{tpu_custom_call.1} parent=1 // pred_region
      _
    $region5: #{tpu_custom_call.1} parent=1 // pred_fallthru
      _
    // Predicated region
    $region6: #{tpu_custom_call.1} parent=1 // pred_check
      _
    $region7: #{tpu_custom_call.1} parent=1 // pred_check_branch
      %21 = sbr.rel (0) target = $region9
    $region8: #{tpu_custom_call.1} parent=1 // pred_region
      _
    $region9: #{tpu_custom_call.1} parent=1 // pred_fallthru
      _
    // Predicated region
    $region10: #{tpu_custom_call.1} parent=1 // pred_check
      _
    $region11: #{tpu_custom_call.1} parent=1 // pred_check_branch
      %23 = sbr.rel (0) target = $region13
    $region12: #{tpu_custom_call.1} parent=1 // pred_region
      %s25 = ssub.s32 8192, 8192
      %26 = vsyncadd [#allocation4], %s25
      %s27 = sshll.u32 [#allocation3], 4
      %s28 = int_to_ptr.vmem [resolvable:$true] %s27
      %33 = dma.hbm_to_vmem [thread:$0]  %s2, 8192, %s28, [#allocation4], 128, 128, 8
    $region13: #{tpu_custom_call.1} parent=1 // pred_fallthru
      _
    // Predicated region
    $region14: #{tpu_custom_call.1} parent=1 // pred_check
      _
    $region15: #{tpu_custom_call.1} parent=1 // pred_check_branch
      %35 = sbr.rel (0) target = $region17
    $region16: #{tpu_custom_call.1} parent=1 // pred_region
      _
    $region17: #{tpu_custom_call.1} parent=1 // pred_fallthru
      _
    // Predicated region
    $region18: #{tpu_custom_call.1} parent=1 // pred_check
      _
    $region19: #{tpu_custom_call.1} parent=1 // pred_check_branch
      %37 = sbr.rel (0) target = $region21
    $region20: #{tpu_custom_call.1} parent=1 // pred_region
      _
    $region21: #{tpu_custom_call.1} parent=1 // pred_fallthru
      _
    // Predicated region
    $region22: #{tpu_custom_call.1} parent=1 // pred_check
      _
    $region23: #{tpu_custom_call.1} parent=1 // pred_check_branch
      %39 = sbr.rel (0) target = $region25
    $region24: #{tpu_custom_call.1} parent=1 // pred_region
      _
    $region25: #{tpu_custom_call.1} parent=1 // pred_fallthru
      _
    // Predicated region
    $region26: #{tpu_custom_call.1} parent=1 // pred_check
      _
    $region27: #{tpu_custom_call.1} parent=1 // pred_check_branch
      %41 = sbr.rel (0) target = $region29
    $region28: #{tpu_custom_call.1} parent=1 // pred_region
      %s43 = ssub.s32 8192, 8192
      %44 = vsyncadd [#allocation6], %s43
      %s45 = sshll.u32 [#allocation5], 4
      %s46 = int_to_ptr.vmem [resolvable:$true] %s45
      %51 = dma.hbm_to_vmem [thread:$0]  %s6, 8192, %s46, [#allocation6], 128, 128, 8
    $region29: #{tpu_custom_call.1} parent=1 // pred_fallthru
      _
    // Predicated region
    $region30: #{tpu_custom_call.1} parent=1 // pred_check
      _
    $region31: #{tpu_custom_call.1} parent=1 // pred_check_branch
      %53 = sbr.rel (0) target = $region33
    $region32: #{tpu_custom_call.1} parent=1 // pred_region
      _
    $region33: #{tpu_custom_call.1} parent=1 // pred_fallthru
      _
    // Predicated region
    $region34: #{tpu_custom_call.1} parent=1 // pred_check
      _
    $region35: #{tpu_custom_call.1} parent=1 // pred_check_branch
      %55 = sbr.rel (0) target = $region37
    $region36: #{tpu_custom_call.1} parent=1 // pred_region
      _
    $region37: #{tpu_custom_call.1} parent=1 // pred_fallthru
      _
    // Predicated region
    $region38: #{tpu_custom_call.1} parent=1 // pred_check
      _
    $region39: #{tpu_custom_call.1} parent=1 // pred_check_branch
      %57 = sbr.rel (0) target = $region41
    $region40: #{tpu_custom_call.1} parent=1 // pred_region
      %58 = dma.done [#allocation4], 8192
    $region41: #{tpu_custom_call.1} parent=1 // pred_fallthru
      _
    // Predicated region
    $region42: #{tpu_custom_call.1} parent=1 // pred_check
      _
    $region43: #{tpu_custom_call.1} parent=1 // pred_check_branch
      %60 = sbr.rel (0) target = $region45
    $region44: #{tpu_custom_call.1} parent=1 // pred_region
      %61 = dma.done [#allocation6], 8192
    $region45: #{tpu_custom_call.1} parent=1 // pred_fallthru
      _
    %vm63 = vcmask 130048
    %64 = vst.msk [vmem:[#allocation2] sm:$0xff] %vm63, 0.0
    %65 = vst.msk [vmem:[#allocation2 + $0x8] sm:$0xff] %vm63, 0.0
    %66 = vst.msk [vmem:[#allocation2 + $0x10] sm:$0xff] %vm63, 0.0
    %67 = vst.msk [vmem:[#allocation2 + $0x18] sm:$0xff] %vm63, 0.0
    %68 = vst.msk [vmem:[#allocation2 + $0x20] sm:$0xff] %vm63, 0.0
    %69 = vst.msk [vmem:[#allocation2 + $0x28] sm:$0xff] %vm63, 0.0
    %70 = vst.msk [vmem:[#allocation2 + $0x30] sm:$0xff] %vm63, 0.0
    %71 = vst.msk [vmem:[#allocation2 + $0x38] sm:$0xff] %vm63, 0.0
    %v72 = vld [vmem:[%s0] sm:$0xff]
    %v73 = vld [vmem:[%s0 + $0x8] sm:$0xff]
    %v74 = vld [vmem:[%s0 + $0x10] sm:$0xff]
    %v75 = vld [vmem:[%s0 + $0x18] sm:$0xff]
    %v76 = vld [vmem:[%s0 + $0x20] sm:$0xff]
    %v77 = vld [vmem:[%s0 + $0x28] sm:$0xff]
    %v78 = vld [vmem:[%s0 + $0x30] sm:$0xff]
    %v79 = vld [vmem:[%s0 + $0x38] sm:$0xff]
    %vm80 = vcmask 80896
    %81 = vst.msk [vmem:[#allocation2] sm:$0xff] %vm80, %v72
    %82 = vst.msk [vmem:[#allocation2 + $0x8] sm:$0xff] %vm80, %v73
    %83 = vst.msk [vmem:[#allocation2 + $0x10] sm:$0xff] %vm80, %v74
    %84 = vst.msk [vmem:[#allocation2 + $0x18] sm:$0xff] %vm80, %v75
    %85 = vst.msk [vmem:[#allocation2 + $0x20] sm:$0xff] %vm80, %v76
    %86 = vst.msk [vmem:[#allocation2 + $0x28] sm:$0xff] %vm80, %v77
    %87 = vst.msk [vmem:[#allocation2 + $0x30] sm:$0xff] %vm80, %v78
    %88 = vst.msk [vmem:[#allocation2 + $0x38] sm:$0xff] %vm80, %v79
    %v89 = vld [vmem:[#allocation2] sm:$0xff]
    %v90 = vld [vmem:[#allocation2 + $0x8] sm:$0xff]
    %v91 = vld [vmem:[#allocation2 + $0x10] sm:$0xff]
    %v92 = vld [vmem:[#allocation2 + $0x18] sm:$0xff]
    %v93 = vld [vmem:[#allocation2 + $0x20] sm:$0xff]
    %v94 = vld [vmem:[#allocation2 + $0x28] sm:$0xff]
    %v95 = vld [vmem:[#allocation2 + $0x30] sm:$0xff]
    %v96 = vld [vmem:[#allocation2 + $0x38] sm:$0xff]
    %v97 = vld [vmem:[%s1] sm:$0xff]
    %v98 = vld [vmem:[%s1 + $0x8] sm:$0xff]
    %v99 = vpack.c.bf16 %v90, %v89
    %v100 = vpack.c.bf16 %v92, %v91
    %v101 = vpack.c.bf16 %v94, %v93
    %v102 = vpack.c.bf16 %v96, %v95
    %v103 = vld [vmem:[%s4] ss:$8 sm:$0x3]
    %v105 = vlaneseq
    %v106 = vshrl.u32 %v105, 7
    %v107 = vsub.s32 0, %v106
    %v108 = vrot.slane %v103, %v107
    %v109 = vlaneseq
    %v110 = vshrl.u32 %v109, 7
    %v111 = vsub.s32 1, %v110
    %v112 = vrot.slane %v103, %v111
    %v117 = vunpack.c.l.b16 %v97
    %v118 = vunpack.c.h.b16 %v97
    %v119 = vunpack.c.l.b16 %v98
    %v120 = vunpack.c.h.b16 %v98
    %v121 = vpack.c.b16 %v119, %v117
    %v122 = vpack.c.b16 %v120, %v118
    %v126 = vsel %vm63, %v99, 0
    %v129 = vsel %vm63, %v100, 0
    %v132 = vsel %vm63, %v101, 0
    %v135 = vsel %vm63, %v102, 0
    %137 = vmatprep.subr.bf16.mxu0 %v122
    %138 = vmatpush1.bf16.msra.mxu0 %v121
    %139 = vmatprep.subr.bf16.mxu0 0
    %140 = vmatpush1.bf16.msra.mxu0 0
    %141 = vmatprep.subr.bf16.mxu0 0
    %142 = vmatpush1.bf16.msra.mxu0 0
    %143 = vmatprep.subr.bf16.mxu0 0
    %144 = vmatpush1.bf16.msra.mxu0 0
    %145 = vmatprep.subr.bf16.mxu0 0
    %146 = vmatpush1.bf16.msra.mxu0 0
    %147 = vmatprep.subr.bf16.mxu0 0
    %148 = vmatpush1.bf16.msra.mxu0 0
    %149 = vmatprep.subr.bf16.mxu0 0
    %150 = vmatpush1.bf16.msra.mxu0 0
    %151 = vmatprep.subr.bf16.mxu0 0
    %152 = vmatpush1.bf16.msra.mxu0 0
    %153 = vmatprep.subr.bf16.mxu0 0
    %154 = vmatpush1.bf16.msra.mxu0 0
    %155 = vmatprep.subr.bf16.mxu0 0
    %156 = vmatpush1.bf16.msra.mxu0 0
    %157 = vmatprep.subr.bf16.mxu0 0
    %158 = vmatpush1.bf16.msra.mxu0 0
    %159 = vmatprep.subr.bf16.mxu0 0
    %160 = vmatpush1.bf16.msra.mxu0 0
    %161 = vmatprep.subr.bf16.mxu0 0
    %162 = vmatpush1.bf16.msra.mxu0 0
    %163 = vmatprep.subr.bf16.mxu0 0
    %164 = vmatpush1.bf16.msra.mxu0 0
    %165 = vmatprep.subr.bf16.mxu0 0
    %166 = vmatpush1.bf16.msra.mxu0 0
    %167 = vmatprep.subr.bf16.mxu0 0
    %168 = vmatpush1.bf16.msra.mxu0 0
    %169 = vmatprep.mubr.bf16.mxu0 0
    %170 = vmatmul.mubr.bf16.gmra.mrb[0].mxu0 %v126
    %v171 = vpop.f32.mrb[0].mxu0
    %v172 = vadd.f32 %v108, %v171
    %v173 = vpop.f32.mrb[0].mxu0
    %v174 = vadd.f32 %v112, %v173
    %v175 = vpop.f32.mrb[0].mxu0
    %v176 = vadd.f32 %v108, %v175
    %v177 = vpop.f32.mrb[0].mxu0
    %v178 = vadd.f32 %v112, %v177
    %179 = vmatprep.mubr.bf16.mxu0 0
    %180 = vmatmul.mubr.bf16.gmra.mrb[0].mxu0 %v129
    %v181 = vpop.f32.mrb[0].mxu0
    %v182 = vadd.f32 %v108, %v181
    %v183 = vpop.f32.mrb[0].mxu0
    %v184 = vadd.f32 %v112, %v183
    %v185 = vpop.f32.mrb[0].mxu0
    %v186 = vadd.f32 %v108, %v185
    %v187 = vpop.f32.mrb[0].mxu0
    %v188 = vadd.f32 %v112, %v187
    %189 = vmatprep.mubr.bf16.mxu0 0
    %190 = vmatmul.mubr.bf16.gmra.mrb[0].mxu0 %v132
    %v191 = vpop.f32.mrb[0].mxu0
    %v192 = vadd.f32 %v108, %v191
    %v193 = vpop.f32.mrb[0].mxu0
    %v194 = vadd.f32 %v112, %v193
    %v195 = vpop.f32.mrb[0].mxu0
    %v196 = vadd.f32 %v108, %v195
    %v197 = vpop.f32.mrb[0].mxu0
    %v198 = vadd.f32 %v112, %v197
    %199 = vmatprep.mubr.bf16.mxu0 0
    %200 = vmatmul.mubr.bf16.gmra.mrb[0].mxu0 %v135
    %v201 = vpop.f32.mrb[0].mxu0
    %v202 = vadd.f32 %v108, %v201
    %v203 = vpop.f32.mrb[0].mxu0
    %v204 = vadd.f32 %v112, %v203
    %v205 = vpop.f32.mrb[0].mxu0
    %v206 = vadd.f32 %v108, %v205
    %v207 = vpop.f32.mrb[0].mxu0
    %v208 = vadd.f32 %v112, %v207
    %209 = vdwg.mxu0
    %v210 = vmax.f32 %v172, 0.0
    %v211 = vmax.f32 %v174, 0.0
    %v212 = vmax.f32 %v176, 0.0
    %v213 = vmax.f32 %v178, 0.0
    %v214 = vmax.f32 %v182, 0.0
    %v215 = vmax.f32 %v184, 0.0
    %v216 = vmax.f32 %v186, 0.0
    %v217 = vmax.f32 %v188, 0.0
    %v218 = vmax.f32 %v192, 0.0
    %v219 = vmax.f32 %v194, 0.0
    %v220 = vmax.f32 %v196, 0.0
    %v221 = vmax.f32 %v198, 0.0
    %v222 = vmax.f32 %v202, 0.0
    %v223 = vmax.f32 %v204, 0.0
    %v224 = vmax.f32 %v206, 0.0
    %v225 = vmax.f32 %v208, 0.0
    %v226 = vld [vmem:[#allocation3] sm:$0xff]
    %v227 = vld [vmem:[#allocation3 + $0x8] sm:$0xff]
    %v228 = vld [vmem:[#allocation3 + $0x10] sm:$0xff]
    %v229 = vld [vmem:[#allocation3 + $0x18] sm:$0xff]
    %v230 = vld [vmem:[#allocation3 + $0x20] sm:$0xff]
    %v231 = vld [vmem:[#allocation3 + $0x28] sm:$0xff]
    %v232 = vld [vmem:[#allocation3 + $0x30] sm:$0xff]
    %v233 = vld [vmem:[#allocation3 + $0x38] sm:$0xff]
    %v234 = vld [vmem:[#allocation3 + $0x40] sm:$0xff]
    %v235 = vld [vmem:[#allocation3 + $0x48] sm:$0xff]
    %v236 = vld [vmem:[#allocation3 + $0x50] sm:$0xff]
    %v237 = vld [vmem:[#allocation3 + $0x58] sm:$0xff]
    %v238 = vld [vmem:[#allocation3 + $0x60] sm:$0xff]
    %v239 = vld [vmem:[#allocation3 + $0x68] sm:$0xff]
    %v240 = vld [vmem:[#allocation3 + $0x70] sm:$0xff]
    %v241 = vld [vmem:[#allocation3 + $0x78] sm:$0xff]
    %v242 = vld [vmem:[#allocation3 + $0x80] sm:$0xff]
    %v243 = vld [vmem:[#allocation3 + $0x88] sm:$0xff]
    %v244 = vld [vmem:[#allocation3 + $0x90] sm:$0xff]
    %v245 = vld [vmem:[#allocation3 + $0x98] sm:$0xff]
    %v246 = vld [vmem:[#allocation3 + $0xa0] sm:$0xff]
    %v247 = vld [vmem:[#allocation3 + $0xa8] sm:$0xff]
    %v248 = vld [vmem:[#allocation3 + $0xb0] sm:$0xff]
    %v249 = vld [vmem:[#allocation3 + $0xb8] sm:$0xff]
    %v250 = vld [vmem:[#allocation3 + $0xc0] sm:$0xff]
    %v251 = vld [vmem:[#allocation3 + $0xc8] sm:$0xff]
    %v252 = vld [vmem:[#allocation3 + $0xd0] sm:$0xff]
    %v253 = vld [vmem:[#allocation3 + $0xd8] sm:$0xff]
    %v254 = vld [vmem:[#allocation3 + $0xe0] sm:$0xff]
    %v255 = vld [vmem:[#allocation3 + $0xe8] sm:$0xff]
    %v256 = vld [vmem:[#allocation3 + $0xf0] sm:$0xff]
    %v257 = vld [vmem:[#allocation3 + $0xf8] sm:$0xff]
    %v258 = vpack.c.bf16 %v212, %v210
    %v259 = vpack.c.bf16 %v213, %v211
    %v260 = vpack.c.bf16 %v216, %v214
    %v261 = vpack.c.bf16 %v217, %v215
    %v262 = vpack.c.bf16 %v220, %v218
    %v263 = vpack.c.bf16 %v221, %v219
    %v264 = vpack.c.bf16 %v224, %v222
    %v265 = vpack.c.bf16 %v225, %v223
    %s266 = scalar_lea.vmem %s4, 1
    %v267 = vld [vmem:[%s266] ss:$8 sm:$0x3]
    %v269 = vlaneseq
    %v270 = vshrl.u32 %v269, 7
    %v271 = vsub.s32 0, %v270
    %v272 = vrot.slane %v267, %v271
    %v273 = vlaneseq
    %v274 = vshrl.u32 %v273, 7
    %v275 = vsub.s32 1, %v274
    %v276 = vrot.slane %v267, %v275
    %v311 = vunpack.c.l.b16 %v226
    %v312 = vunpack.c.h.b16 %v226
    %v313 = vunpack.c.l.b16 %v227
    %v314 = vunpack.c.h.b16 %v227
    %v315 = vunpack.c.l.b16 %v228
    %v316 = vunpack.c.h.b16 %v228
    %v317 = vunpack.c.l.b16 %v229
    %v318 = vunpack.c.h.b16 %v229
    %v319 = vunpack.c.l.b16 %v230
    %v320 = vunpack.c.h.b16 %v230
    %v321 = vunpack.c.l.b16 %v231
    %v322 = vunpack.c.h.b16 %v231
    %v323 = vunpack.c.l.b16 %v232
    %v324 = vunpack.c.h.b16 %v232
    %v325 = vunpack.c.l.b16 %v233
    %v326 = vunpack.c.h.b16 %v233
    %v327 = vunpack.c.l.b16 %v234
    %v328 = vunpack.c.h.b16 %v234
    %v329 = vunpack.c.l.b16 %v235
    %v330 = vunpack.c.h.b16 %v235
    %v331 = vunpack.c.l.b16 %v236
    %v332 = vunpack.c.h.b16 %v236
    %v333 = vunpack.c.l.b16 %v237
    %v334 = vunpack.c.h.b16 %v237
    %v335 = vunpack.c.l.b16 %v238
    %v336 = vunpack.c.h.b16 %v238
    %v337 = vunpack.c.l.b16 %v239
    %v338 = vunpack.c.h.b16 %v239
    %v339 = vunpack.c.l.b16 %v240
    %v340 = vunpack.c.h.b16 %v240
    %v341 = vunpack.c.l.b16 %v241
    %v342 = vunpack.c.h.b16 %v241
    %v343 = vunpack.c.l.b16 %v242
    %v344 = vunpack.c.h.b16 %v242
    %v345 = vunpack.c.l.b16 %v243
    %v346 = vunpack.c.h.b16 %v243
    %v347 = vunpack.c.l.b16 %v244
    %v348 = vunpack.c.h.b16 %v244
    %v349 = vunpack.c.l.b16 %v245
    %v350 = vunpack.c.h.b16 %v245
    %v351 = vunpack.c.l.b16 %v246
    %v352 = vunpack.c.h.b16 %v246
    %v353 = vunpack.c.l.b16 %v247
    %v354 = vunpack.c.h.b16 %v247
    %v355 = vunpack.c.l.b16 %v248
    %v356 = vunpack.c.h.b16 %v248
    %v357 = vunpack.c.l.b16 %v249
    %v358 = vunpack.c.h.b16 %v249
    %v359 = vunpack.c.l.b16 %v250
    %v360 = vunpack.c.h.b16 %v250
    %v361 = vunpack.c.l.b16 %v251
    %v362 = vunpack.c.h.b16 %v251
    %v363 = vunpack.c.l.b16 %v252
    %v364 = vunpack.c.h.b16 %v252
    %v365 = vunpack.c.l.b16 %v253
    %v366 = vunpack.c.h.b16 %v253
    %v367 = vunpack.c.l.b16 %v254
    %v368 = vunpack.c.h.b16 %v254
    %v369 = vunpack.c.l.b16 %v255
    %v370 = vunpack.c.h.b16 %v255
    %v371 = vunpack.c.l.b16 %v256
    %v372 = vunpack.c.h.b16 %v256
    %v373 = vunpack.c.l.b16 %v257
    %v374 = vunpack.c.h.b16 %v257
    %v375 = vpack.c.b16 %v313, %v311
    %v376 = vpack.c.b16 %v314, %v312
    %v377 = vpack.c.b16 %v317, %v315
    %v378 = vpack.c.b16 %v318, %v316
    %v379 = vpack.c.b16 %v321, %v319
    %v380 = vpack.c.b16 %v322, %v320
    %v381 = vpack.c.b16 %v325, %v323
    %v382 = vpack.c.b16 %v326, %v324
    %v383 = vpack.c.b16 %v329, %v327
    %v384 = vpack.c.b16 %v330, %v328
    %v385 = vpack.c.b16 %v333, %v331
    %v386 = vpack.c.b16 %v334, %v332
    %v387 = vpack.c.b16 %v337, %v335
    %v388 = vpack.c.b16 %v338, %v336
    %v389 = vpack.c.b16 %v341, %v339
    %v390 = vpack.c.b16 %v342, %v340
    %v391 = vpack.c.b16 %v345, %v343
    %v392 = vpack.c.b16 %v346, %v344
    %v393 = vpack.c.b16 %v349, %v347
    %v394 = vpack.c.b16 %v350, %v348
    %v395 = vpack.c.b16 %v353, %v351
    %v396 = vpack.c.b16 %v354, %v352
    %v397 = vpack.c.b16 %v357, %v355
    %v398 = vpack.c.b16 %v358, %v356
    %v399 = vpack.c.b16 %v361, %v359
    %v400 = vpack.c.b16 %v362, %v360
    %v401 = vpack.c.b16 %v365, %v363
    %v402 = vpack.c.b16 %v366, %v364
    %v403 = vpack.c.b16 %v369, %v367
    %v404 = vpack.c.b16 %v370, %v368
    %v405 = vpack.c.b16 %v373, %v371
    %v406 = vpack.c.b16 %v374, %v372
    %439 = vmatprep.subr.bf16.mxu0 %v376
    %440 = vmatpush1.bf16.msra.mxu0 %v375
    %441 = vmatprep.subr.bf16.mxu0 %v378
    %442 = vmatpush1.bf16.msra.mxu0 %v377
    %443 = vmatprep.subr.bf16.mxu0 %v380
    %444 = vmatpush1.bf16.msra.mxu0 %v379
    %445 = vmatprep.subr.bf16.mxu0 %v382
    %446 = vmatpush1.bf16.msra.mxu0 %v381
    %447 = vmatprep.subr.bf16.mxu0 %v384
    %448 = vmatpush1.bf16.msra.mxu0 %v383
    %449 = vmatprep.subr.bf16.mxu0 %v386
    %450 = vmatpush1.bf16.msra.mxu0 %v385
    %451 = vmatprep.subr.bf16.mxu0 %v388
    %452 = vmatpush1.bf16.msra.mxu0 %v387
    %453 = vmatprep.subr.bf16.mxu0 %v390
    %454 = vmatpush1.bf16.msra.mxu0 %v389
    %455 = vmatprep.subr.bf16.mxu0 %v392
    %456 = vmatpush1.bf16.msra.mxu0 %v391
    %457 = vmatprep.subr.bf16.mxu0 %v394
    %458 = vmatpush1.bf16.msra.mxu0 %v393
    %459 = vmatprep.subr.bf16.mxu0 %v396
    %460 = vmatpush1.bf16.msra.mxu0 %v395
    %461 = vmatprep.subr.bf16.mxu0 %v398
    %462 = vmatpush1.bf16.msra.mxu0 %v397
    %463 = vmatprep.subr.bf16.mxu0 %v400
    %464 = vmatpush1.bf16.msra.mxu0 %v399
    %465 = vmatprep.subr.bf16.mxu0 %v402
    %466 = vmatpush1.bf16.msra.mxu0 %v401
    %467 = vmatprep.subr.bf16.mxu0 %v404
    %468 = vmatpush1.bf16.msra.mxu0 %v403
    %469 = vmatprep.subr.bf16.mxu0 %v406
    %470 = vmatpush1.bf16.msra.mxu0 %v405
    %471 = vmatprep.mubr.bf16.mxu0 %v259
    %472 = vmatmul.mubr.bf16.gmra.mrb[0].mxu0 %v258
    %v473 = vpop.f32.mrb[0].mxu0
    %v474 = vadd.f32 %v272, %v473
    %v475 = vpop.f32.mrb[0].mxu0
    %v476 = vadd.f32 %v276, %v475
    %v477 = vpop.f32.mrb[0].mxu0
    %v478 = vadd.f32 %v272, %v477
    %v479 = vpop.f32.mrb[0].mxu0
    %v480 = vadd.f32 %v276, %v479
    %481 = vmatprep.mubr.bf16.mxu0 %v261
    %482 = vmatmul.mubr.bf16.gmra.mrb[0].mxu0 %v260
    %v483 = vpop.f32.mrb[0].mxu0
    %v484 = vadd.f32 %v272, %v483
    %v485 = vpop.f32.mrb[0].mxu0
    %v486 = vadd.f32 %v276, %v485
    %v487 = vpop.f32.mrb[0].mxu0
    %v488 = vadd.f32 %v272, %v487
    %v489 = vpop.f32.mrb[0].mxu0
    %v490 = vadd.f32 %v276, %v489
    %491 = vmatprep.mubr.bf16.mxu0 %v263
    %492 = vmatmul.mubr.bf16.gmra.mrb[0].mxu0 %v262
    %v493 = vpop.f32.mrb[0].mxu0
    %v494 = vadd.f32 %v272, %v493
    %v495 = vpop.f32.mrb[0].mxu0
    %v496 = vadd.f32 %v276, %v495
    %v497 = vpop.f32.mrb[0].mxu0
    %v498 = vadd.f32 %v272, %v497
    %v499 = vpop.f32.mrb[0].mxu0
    %v500 = vadd.f32 %v276, %v499
    %501 = vmatprep.mubr.bf16.mxu0 %v265
    %502 = vmatmul.mubr.bf16.gmra.mrb[0].mxu0 %v264
    %v503 = vpop.f32.mrb[0].mxu0
    %v504 = vadd.f32 %v272, %v503
    %v505 = vpop.f32.mrb[0].mxu0
    %v506 = vadd.f32 %v276, %v505
    %v507 = vpop.f32.mrb[0].mxu0
    %v508 = vadd.f32 %v272, %v507
    %v509 = vpop.f32.mrb[0].mxu0
    %v510 = vadd.f32 %v276, %v509
    %511 = vdwg.mxu0
    %v512 = vmax.f32 %v474, 0.0
    %v513 = vmax.f32 %v476, 0.0
    %v514 = vmax.f32 %v478, 0.0
    %v515 = vmax.f32 %v480, 0.0
    %v516 = vmax.f32 %v484, 0.0
    %v517 = vmax.f32 %v486, 0.0
    %v518 = vmax.f32 %v488, 0.0
    %v519 = vmax.f32 %v490, 0.0
    %v520 = vmax.f32 %v494, 0.0
    %v521 = vmax.f32 %v496, 0.0
    %v522 = vmax.f32 %v498, 0.0
    %v523 = vmax.f32 %v500, 0.0
    %v524 = vmax.f32 %v504, 0.0
    %v525 = vmax.f32 %v506, 0.0
    %v526 = vmax.f32 %v508, 0.0
    %v527 = vmax.f32 %v510, 0.0
    %s528 = scalar_lea.vmem [#allocation3], 256
    %v529 = vld [vmem:[%s528] sm:$0xff]
    %v530 = vld [vmem:[%s528 + $0x8] sm:$0xff]
    %v531 = vld [vmem:[%s528 + $0x10] sm:$0xff]
    %v532 = vld [vmem:[%s528 + $0x18] sm:$0xff]
    %v533 = vld [vmem:[%s528 + $0x20] sm:$0xff]
    %v534 = vld [vmem:[%s528 + $0x28] sm:$0xff]
    %v535 = vld [vmem:[%s528 + $0x30] sm:$0xff]
    %v536 = vld [vmem:[%s528 + $0x38] sm:$0xff]
    %v537 = vld [vmem:[%s528 + $0x40] sm:$0xff]
    %v538 = vld [vmem:[%s528 + $0x48] sm:$0xff]
    %v539 = vld [vmem:[%s528 + $0x50] sm:$0xff]
    %v540 = vld [vmem:[%s528 + $0x58] sm:$0xff]
    %v541 = vld [vmem:[%s528 + $0x60] sm:$0xff]
    %v542 = vld [vmem:[%s528 + $0x68] sm:$0xff]
    %v543 = vld [vmem:[%s528 + $0x70] sm:$0xff]
    %v544 = vld [vmem:[%s528 + $0x78] sm:$0xff]
    %v545 = vld [vmem:[%s528 + $0x80] sm:$0xff]
    %v546 = vld [vmem:[%s528 + $0x88] sm:$0xff]
    %v547 = vld [vmem:[%s528 + $0x90] sm:$0xff]
    %v548 = vld [vmem:[%s528 + $0x98] sm:$0xff]
    %v549 = vld [vmem:[%s528 + $0xa0] sm:$0xff]
    %v550 = vld [vmem:[%s528 + $0xa8] sm:$0xff]
    %v551 = vld [vmem:[%s528 + $0xb0] sm:$0xff]
    %v552 = vld [vmem:[%s528 + $0xb8] sm:$0xff]
    %v553 = vld [vmem:[%s528 + $0xc0] sm:$0xff]
    %v554 = vld [vmem:[%s528 + $0xc8] sm:$0xff]
    %v555 = vld [vmem:[%s528 + $0xd0] sm:$0xff]
    %v556 = vld [vmem:[%s528 + $0xd8] sm:$0xff]
    %v557 = vld [vmem:[%s528 + $0xe0] sm:$0xff]
    %v558 = vld [vmem:[%s528 + $0xe8] sm:$0xff]
    %v559 = vld [vmem:[%s528 + $0xf0] sm:$0xff]
    %v560 = vld [vmem:[%s528 + $0xf8] sm:$0xff]
    %v561 = vpack.c.bf16 %v514, %v512
    %v562 = vpack.c.bf16 %v515, %v513
    %v563 = vpack.c.bf16 %v518, %v516
    %v564 = vpack.c.bf16 %v519, %v517
    %v565 = vpack.c.bf16 %v522, %v520
    %v566 = vpack.c.bf16 %v523, %v521
    %v567 = vpack.c.bf16 %v526, %v524
    %v568 = vpack.c.bf16 %v527, %v525
    %s569 = scalar_lea.vmem %s4, 2
    %v570 = vld [vmem:[%s569] ss:$8 sm:$0x3]
    %v572 = vlaneseq
    %v573 = vshrl.u32 %v572, 7
    %v574 = vsub.s32 0, %v573
    %v575 = vrot.slane %v570, %v574
    %v576 = vlaneseq
    %v577 = vshrl.u32 %v576, 7
    %v578 = vsub.s32 1, %v577
    %v579 = vrot.slane %v570, %v578
    %v614 = vunpack.c.l.b16 %v529
    %v615 = vunpack.c.h.b16 %v529
    %v616 = vunpack.c.l.b16 %v530
    %v617 = vunpack.c.h.b16 %v530
    %v618 = vunpack.c.l.b16 %v531
    %v619 = vunpack.c.h.b16 %v531
    %v620 = vunpack.c.l.b16 %v532
    %v621 = vunpack.c.h.b16 %v532
    %v622 = vunpack.c.l.b16 %v533
    %v623 = vunpack.c.h.b16 %v533
    %v624 = vunpack.c.l.b16 %v534
    %v625 = vunpack.c.h.b16 %v534
    %v626 = vunpack.c.l.b16 %v535
    %v627 = vunpack.c.h.b16 %v535
    %v628 = vunpack.c.l.b16 %v536
    %v629 = vunpack.c.h.b16 %v536
    %v630 = vunpack.c.l.b16 %v537
    %v631 = vunpack.c.h.b16 %v537
    %v632 = vunpack.c.l.b16 %v538
    %v633 = vunpack.c.h.b16 %v538
    %v634 = vunpack.c.l.b16 %v539
    %v635 = vunpack.c.h.b16 %v539
    %v636 = vunpack.c.l.b16 %v540
    %v637 = vunpack.c.h.b16 %v540
    %v638 = vunpack.c.l.b16 %v541
    %v639 = vunpack.c.h.b16 %v541
    %v640 = vunpack.c.l.b16 %v542
    %v641 = vunpack.c.h.b16 %v542
    %v642 = vunpack.c.l.b16 %v543
    %v643 = vunpack.c.h.b16 %v543
    %v644 = vunpack.c.l.b16 %v544
    %v645 = vunpack.c.h.b16 %v544
    %v646 = vunpack.c.l.b16 %v545
    %v647 = vunpack.c.h.b16 %v545
    %v648 = vunpack.c.l.b16 %v546
    %v649 = vunpack.c.h.b16 %v546
    %v650 = vunpack.c.l.b16 %v547
    %v651 = vunpack.c.h.b16 %v547
    %v652 = vunpack.c.l.b16 %v548
    %v653 = vunpack.c.h.b16 %v548
    %v654 = vunpack.c.l.b16 %v549
    %v655 = vunpack.c.h.b16 %v549
    %v656 = vunpack.c.l.b16 %v550
    %v657 = vunpack.c.h.b16 %v550
    %v658 = vunpack.c.l.b16 %v551
    %v659 = vunpack.c.h.b16 %v551
    %v660 = vunpack.c.l.b16 %v552
    %v661 = vunpack.c.h.b16 %v552
    %v662 = vunpack.c.l.b16 %v553
    %v663 = vunpack.c.h.b16 %v553
    %v664 = vunpack.c.l.b16 %v554
    %v665 = vunpack.c.h.b16 %v554
    %v666 = vunpack.c.l.b16 %v555
    %v667 = vunpack.c.h.b16 %v555
    %v668 = vunpack.c.l.b16 %v556
    %v669 = vunpack.c.h.b16 %v556
    %v670 = vunpack.c.l.b16 %v557
    %v671 = vunpack.c.h.b16 %v557
    %v672 = vunpack.c.l.b16 %v558
    %v673 = vunpack.c.h.b16 %v558
    %v674 = vunpack.c.l.b16 %v559
    %v675 = vunpack.c.h.b16 %v559
    %v676 = vunpack.c.l.b16 %v560
    %v677 = vunpack.c.h.b16 %v560
    %v678 = vpack.c.b16 %v616, %v614
    %v679 = vpack.c.b16 %v617, %v615
    %v680 = vpack.c.b16 %v620, %v618
    %v681 = vpack.c.b16 %v621, %v619
    %v682 = vpack.c.b16 %v624, %v622
    %v683 = vpack.c.b16 %v625, %v623
    %v684 = vpack.c.b16 %v628, %v626
    %v685 = vpack.c.b16 %v629, %v627
    %v686 = vpack.c.b16 %v632, %v630
    %v687 = vpack.c.b16 %v633, %v631
    %v688 = vpack.c.b16 %v636, %v634
    %v689 = vpack.c.b16 %v637, %v635
    %v690 = vpack.c.b16 %v640, %v638
    %v691 = vpack.c.b16 %v641, %v639
    %v692 = vpack.c.b16 %v644, %v642
    %v693 = vpack.c.b16 %v645, %v643
    %v694 = vpack.c.b16 %v648, %v646
    %v695 = vpack.c.b16 %v649, %v647
    %v696 = vpack.c.b16 %v652, %v650
    %v697 = vpack.c.b16 %v653, %v651
    %v698 = vpack.c.b16 %v656, %v654
    %v699 = vpack.c.b16 %v657, %v655
    %v700 = vpack.c.b16 %v660, %v658
    %v701 = vpack.c.b16 %v661, %v659
    %v702 = vpack.c.b16 %v664, %v662
    %v703 = vpack.c.b16 %v665, %v663
    %v704 = vpack.c.b16 %v668, %v666
    %v705 = vpack.c.b16 %v669, %v667
    %v706 = vpack.c.b16 %v672, %v670
    %v707 = vpack.c.b16 %v673, %v671
    %v708 = vpack.c.b16 %v676, %v674
    %v709 = vpack.c.b16 %v677, %v675
    %742 = vmatprep.subr.bf16.mxu0 %v679
    %743 = vmatpush1.bf16.msra.mxu0 %v678
    %744 = vmatprep.subr.bf16.mxu0 %v681
    %745 = vmatpush1.bf16.msra.mxu0 %v680
    %746 = vmatprep.subr.bf16.mxu0 %v683
    %747 = vmatpush1.bf16.msra.mxu0 %v682
    %748 = vmatprep.subr.bf16.mxu0 %v685
    %749 = vmatpush1.bf16.msra.mxu0 %v684
    %750 = vmatprep.subr.bf16.mxu0 %v687
    %751 = vmatpush1.bf16.msra.mxu0 %v686
    %752 = vmatprep.subr.bf16.mxu0 %v689
    %753 = vmatpush1.bf16.msra.mxu0 %v688
    %754 = vmatprep.subr.bf16.mxu0 %v691
    %755 = vmatpush1.bf16.msra.mxu0 %v690
    %756 = vmatprep.subr.bf16.mxu0 %v693
    %757 = vmatpush1.bf16.msra.mxu0 %v692
    %758 = vmatprep.subr.bf16.mxu0 %v695
    %759 = vmatpush1.bf16.msra.mxu0 %v694
    %760 = vmatprep.subr.bf16.mxu0 %v697
    %761 = vmatpush1.bf16.msra.mxu0 %v696
    %762 = vmatprep.subr.bf16.mxu0 %v699
    %763 = vmatpush1.bf16.msra.mxu0 %v698
    %764 = vmatprep.subr.bf16.mxu0 %v701
    %765 = vmatpush1.bf16.msra.mxu0 %v700
    %766 = vmatprep.subr.bf16.mxu0 %v703
    %767 = vmatpush1.bf16.msra.mxu0 %v702
    %768 = vmatprep.subr.bf16.mxu0 %v705
    %769 = vmatpush1.bf16.msra.mxu0 %v704
    %770 = vmatprep.subr.bf16.mxu0 %v707
    %771 = vmatpush1.bf16.msra.mxu0 %v706
    %772 = vmatprep.subr.bf16.mxu0 %v709
    %773 = vmatpush1.bf16.msra.mxu0 %v708
    %774 = vmatprep.mubr.bf16.mxu0 %v562
    %775 = vmatmul.mubr.bf16.gmra.mrb[0].mxu0 %v561
    %v776 = vpop.f32.mrb[0].mxu0
    %v777 = vadd.f32 %v575, %v776
    %v778 = vpop.f32.mrb[0].mxu0
    %v779 = vadd.f32 %v579, %v778
    %v780 = vpop.f32.mrb[0].mxu0
    %v781 = vadd.f32 %v575, %v780
    %v782 = vpop.f32.mrb[0].mxu0
    %v783 = vadd.f32 %v579, %v782
    %784 = vmatprep.mubr.bf16.mxu0 %v564
    %785 = vmatmul.mubr.bf16.gmra.mrb[0].mxu0 %v563
    %v786 = vpop.f32.mrb[0].mxu0
    %v787 = vadd.f32 %v575, %v786
    %v788 = vpop.f32.mrb[0].mxu0
    %v789 = vadd.f32 %v579, %v788
    %v790 = vpop.f32.mrb[0].mxu0
    %v791 = vadd.f32 %v575, %v790
    %v792 = vpop.f32.mrb[0].mxu0
    %v793 = vadd.f32 %v579, %v792
    %794 = vmatprep.mubr.bf16.mxu0 %v566
    %795 = vmatmul.mubr.bf16.gmra.mrb[0].mxu0 %v565
    %v796 = vpop.f32.mrb[0].mxu0
    %v797 = vadd.f32 %v575, %v796
    %v798 = vpop.f32.mrb[0].mxu0
    %v799 = vadd.f32 %v579, %v798
    %v800 = vpop.f32.mrb[0].mxu0
    %v801 = vadd.f32 %v575, %v800
    %v802 = vpop.f32.mrb[0].mxu0
    %v803 = vadd.f32 %v579, %v802
    %804 = vmatprep.mubr.bf16.mxu0 %v568
    %805 = vmatmul.mubr.bf16.gmra.mrb[0].mxu0 %v567
    %v806 = vpop.f32.mrb[0].mxu0
    %v807 = vadd.f32 %v575, %v806
    %v808 = vpop.f32.mrb[0].mxu0
    %v809 = vadd.f32 %v579, %v808
    %v810 = vpop.f32.mrb[0].mxu0
    %v811 = vadd.f32 %v575, %v810
    %v812 = vpop.f32.mrb[0].mxu0
    %v813 = vadd.f32 %v579, %v812
    %814 = vdwg.mxu0
    %v815 = vmax.f32 %v777, 0.0
    %v816 = vmax.f32 %v779, 0.0
    %v817 = vmax.f32 %v781, 0.0
    %v818 = vmax.f32 %v783, 0.0
    %v819 = vmax.f32 %v787, 0.0
    %v820 = vmax.f32 %v789, 0.0
    %v821 = vmax.f32 %v791, 0.0
    %v822 = vmax.f32 %v793, 0.0
    %v823 = vmax.f32 %v797, 0.0
    %v824 = vmax.f32 %v799, 0.0
    %v825 = vmax.f32 %v801, 0.0
    %v826 = vmax.f32 %v803, 0.0
    %v827 = vmax.f32 %v807, 0.0
    %v828 = vmax.f32 %v809, 0.0
    %v829 = vmax.f32 %v811, 0.0
    %v830 = vmax.f32 %v813, 0.0
    %v831 = vadd.f32 %v815, %v210
    %v832 = vadd.f32 %v816, %v211
    %v833 = vadd.f32 %v817, %v212
    %v834 = vadd.f32 %v818, %v213
    %v835 = vadd.f32 %v819, %v214
    %v836 = vadd.f32 %v820, %v215
    %v837 = vadd.f32 %v821, %v216
    %v838 = vadd.f32 %v822, %v217
    %v839 = vadd.f32 %v823, %v218
    %v840 = vadd.f32 %v824, %v219
    %v841 = vadd.f32 %v825, %v220
    %v842 = vadd.f32 %v826, %v221
    %v843 = vadd.f32 %v827, %v222
    %v844 = vadd.f32 %v828, %v223
    %v845 = vadd.f32 %v829, %v224
    %v846 = vadd.f32 %v830, %v225
    %v847 = vld [vmem:[%s3] sm:$0xf]
    %v848 = vld [vmem:[%s3 + $0x4] sm:$0xf]
    %v849 = vld [vmem:[%s3 + $0x8] sm:$0xf]
    %v850 = vld [vmem:[%s3 + $0xc] sm:$0xf]
    %v851 = vld [vmem:[%s3 + $0x10] sm:$0xf]
    %v852 = vld [vmem:[%s3 + $0x14] sm:$0xf]
    %v853 = vld [vmem:[%s3 + $0x18] sm:$0xf]
    %v854 = vld [vmem:[%s3 + $0x1c] sm:$0xf]
    %v855 = vld [vmem:[%s3 + $0x20] sm:$0xf]
    %v856 = vld [vmem:[%s3 + $0x24] sm:$0xf]
    %v857 = vld [vmem:[%s3 + $0x28] sm:$0xf]
    %v858 = vld [vmem:[%s3 + $0x2c] sm:$0xf]
    %v859 = vld [vmem:[%s3 + $0x30] sm:$0xf]
    %v860 = vld [vmem:[%s3 + $0x34] sm:$0xf]
    %v861 = vld [vmem:[%s3 + $0x38] sm:$0xf]
    %v862 = vld [vmem:[%s3 + $0x3c] sm:$0xf]
    %v863 = vld [vmem:[%s3 + $0x40] sm:$0xf]
    %v864 = vld [vmem:[%s3 + $0x44] sm:$0xf]
    %v865 = vld [vmem:[%s3 + $0x48] sm:$0xf]
    %v866 = vld [vmem:[%s3 + $0x4c] sm:$0xf]
    %v867 = vld [vmem:[%s3 + $0x50] sm:$0xf]
    %v868 = vld [vmem:[%s3 + $0x54] sm:$0xf]
    %v869 = vld [vmem:[%s3 + $0x58] sm:$0xf]
    %v870 = vld [vmem:[%s3 + $0x5c] sm:$0xf]
    %v871 = vld [vmem:[%s3 + $0x60] sm:$0xf]
    %v872 = vld [vmem:[%s3 + $0x64] sm:$0xf]
    %v873 = vld [vmem:[%s3 + $0x68] sm:$0xf]
    %v874 = vld [vmem:[%s3 + $0x6c] sm:$0xf]
    %v875 = vld [vmem:[%s3 + $0x70] sm:$0xf]
    %v876 = vld [vmem:[%s3 + $0x74] sm:$0xf]
    %v877 = vld [vmem:[%s3 + $0x78] sm:$0xf]
    %v878 = vld [vmem:[%s3 + $0x7c] sm:$0xf]
    %v879 = vpack.c.bf16 %v833, %v831
    %v880 = vpack.c.bf16 %v834, %v832
    %v881 = vpack.c.bf16 %v837, %v835
    %v882 = vpack.c.bf16 %v838, %v836
    %v883 = vpack.c.bf16 %v841, %v839
    %v884 = vpack.c.bf16 %v842, %v840
    %v885 = vpack.c.bf16 %v845, %v843
    %v886 = vpack.c.bf16 %v846, %v844
    %v887 = vld [vmem:[%s4 + $0x3] ss:$0 sm:$0xff]
    %v920 = vunpack.c.l.b16 %v847
    %v921 = vunpack.c.l.b16 %v848
    %v922 = vunpack.c.l.b16 %v849
    %v923 = vunpack.c.l.b16 %v850
    %v924 = vunpack.c.l.b16 %v851
    %v925 = vunpack.c.l.b16 %v852
    %v926 = vunpack.c.l.b16 %v853
    %v927 = vunpack.c.l.b16 %v854
    %v928 = vunpack.c.l.b16 %v855
    %v929 = vunpack.c.l.b16 %v856
    %v930 = vunpack.c.l.b16 %v857
    %v931 = vunpack.c.l.b16 %v858
    %v932 = vunpack.c.l.b16 %v859
    %v933 = vunpack.c.l.b16 %v860
    %v934 = vunpack.c.l.b16 %v861
    %v935 = vunpack.c.l.b16 %v862
    %v936 = vunpack.c.l.b16 %v863
    %v937 = vunpack.c.l.b16 %v864
    %v938 = vunpack.c.l.b16 %v865
    %v939 = vunpack.c.l.b16 %v866
    %v940 = vunpack.c.l.b16 %v867
    %v941 = vunpack.c.l.b16 %v868
    %v942 = vunpack.c.l.b16 %v869
    %v943 = vunpack.c.l.b16 %v870
    %v944 = vunpack.c.l.b16 %v871
    %v945 = vunpack.c.l.b16 %v872
    %v946 = vunpack.c.l.b16 %v873
    %v947 = vunpack.c.l.b16 %v874
    %v948 = vunpack.c.l.b16 %v875
    %v949 = vunpack.c.l.b16 %v876
    %v950 = vunpack.c.l.b16 %v877
    %v951 = vunpack.c.l.b16 %v878
    %v952 = vpack.c.b16 %v921, %v920
    %v953 = vpack.c.b16 %v923, %v922
    %v954 = vpack.c.b16 %v925, %v924
    %v955 = vpack.c.b16 %v927, %v926
    %v956 = vpack.c.b16 %v929, %v928
    %v957 = vpack.c.b16 %v931, %v930
    %v958 = vpack.c.b16 %v933, %v932
    %v959 = vpack.c.b16 %v935, %v934
    %v960 = vpack.c.b16 %v937, %v936
    %v961 = vpack.c.b16 %v939, %v938
    %v962 = vpack.c.b16 %v941, %v940
    %v963 = vpack.c.b16 %v943, %v942
    %v964 = vpack.c.b16 %v945, %v944
    %v965 = vpack.c.b16 %v947, %v946
    %v966 = vpack.c.b16 %v949, %v948
    %v967 = vpack.c.b16 %v951, %v950
    %984 = vmatprep.subr.bf16.mxu0 0
    %985 = vmatpush1.bf16.msra.mxu0 %v952
    %986 = vmatprep.subr.bf16.mxu0 0
    %987 = vmatpush1.bf16.msra.mxu0 %v953
    %988 = vmatprep.subr.bf16.mxu0 0
    %989 = vmatpush1.bf16.msra.mxu0 %v954
    %990 = vmatprep.subr.bf16.mxu0 0
    %991 = vmatpush1.bf16.msra.mxu0 %v955
    %992 = vmatprep.subr.bf16.mxu0 0
    %993 = vmatpush1.bf16.msra.mxu0 %v956
    %994 = vmatprep.subr.bf16.mxu0 0
    %995 = vmatpush1.bf16.msra.mxu0 %v957
    %996 = vmatprep.subr.bf16.mxu0 0
    %997 = vmatpush1.bf16.msra.mxu0 %v958
    %998 = vmatprep.subr.bf16.mxu0 0
    %999 = vmatpush1.bf16.msra.mxu0 %v959
    %1000 = vmatprep.subr.bf16.mxu0 0
    %1001 = vmatpush1.bf16.msra.mxu0 %v960
    %1002 = vmatprep.subr.bf16.mxu0 0
    %1003 = vmatpush1.bf16.msra.mxu0 %v961
    %1004 = vmatprep.subr.bf16.mxu0 0
    %1005 = vmatpush1.bf16.msra.mxu0 %v962
    %1006 = vmatprep.subr.bf16.mxu0 0
    %1007 = vmatpush1.bf16.msra.mxu0 %v963
    %1008 = vmatprep.subr.bf16.mxu0 0
    %1009 = vmatpush1.bf16.msra.mxu0 %v964
    %1010 = vmatprep.subr.bf16.mxu0 0
    %1011 = vmatpush1.bf16.msra.mxu0 %v965
    %1012 = vmatprep.subr.bf16.mxu0 0
    %1013 = vmatpush1.bf16.msra.mxu0 %v966
    %1014 = vmatprep.subr.bf16.mxu0 0
    %1015 = vmatpush1.bf16.msra.mxu0 %v967
    %1016 = vmatprep.mubr.bf16.mxu0 %v880
    %1017 = vmatmul.mubr.bf16.gmra.mrb[0].mxu0 %v879
    %v1018 = vpop.f32.mrb[0].mxu0
    %v1019 = vadd.f32 %v887, %v1018
    %v1020 = vpop.f32.mrb[0].mxu0
    %v1021 = vpop.f32.mrb[0].mxu0
    %v1022 = vadd.f32 %v887, %v1021
    %v1023 = vpop.f32.mrb[0].mxu0
    %1024 = vmatprep.mubr.bf16.mxu0 %v882
    %1025 = vmatmul.mubr.bf16.gmra.mrb[0].mxu0 %v881
    %v1026 = vpop.f32.mrb[0].mxu0
    %v1027 = vadd.f32 %v887, %v1026
    %v1028 = vpop.f32.mrb[0].mxu0
    %v1029 = vpop.f32.mrb[0].mxu0
    %v1030 = vadd.f32 %v887, %v1029
    %v1031 = vpop.f32.mrb[0].mxu0
    %1032 = vmatprep.mubr.bf16.mxu0 %v884
    %1033 = vmatmul.mubr.bf16.gmra.mrb[0].mxu0 %v883
    %v1034 = vpop.f32.mrb[0].mxu0
    %v1035 = vadd.f32 %v887, %v1034
    %v1036 = vpop.f32.mrb[0].mxu0
    %v1037 = vpop.f32.mrb[0].mxu0
    %v1038 = vadd.f32 %v887, %v1037
    %v1039 = vpop.f32.mrb[0].mxu0
    %1040 = vmatprep.mubr.bf16.mxu0 %v886
    %1041 = vmatmul.mubr.bf16.gmra.mrb[0].mxu0 %v885
    %v1042 = vpop.f32.mrb[0].mxu0
    %v1043 = vadd.f32 %v887, %v1042
    %v1044 = vpop.f32.mrb[0].mxu0
    %v1045 = vpop.f32.mrb[0].mxu0
    %v1046 = vadd.f32 %v887, %v1045
    %v1047 = vpop.f32.mrb[0].mxu0
    %1048 = vdwg.mxu0
    %v1049 = vpack.c.bf16 %v1022, %v1019
    %v1050 = vpack.c.bf16 %v1030, %v1027
    %v1051 = vpack.c.bf16 %v1038, %v1035
    %v1052 = vpack.c.bf16 %v1046, %v1043
    %v1057 = vunpack.c.l.b16 %v1049
    %v1058 = vunpack.c.h.b16 %v1049
    %v1059 = vunpack.c.l.b16 %v1050
    %v1060 = vunpack.c.h.b16 %v1050
    %v1061 = vunpack.c.l.b16 %v1051
    %v1062 = vunpack.c.h.b16 %v1051
    %v1063 = vunpack.c.l.b16 %v1052
    %v1064 = vunpack.c.h.b16 %v1052
    %v1065 = vpack.c.b16 %v1057, %v1057
    %v1066 = vpack.c.b16 %v1058, %v1058
    %v1067 = vpack.c.b16 %v1059, %v1059
    %v1068 = vpack.c.b16 %v1060, %v1060
    %v1069 = vpack.c.b16 %v1061, %v1061
    %v1070 = vpack.c.b16 %v1062, %v1062
    %v1071 = vpack.c.b16 %v1063, %v1063
    %v1072 = vpack.c.b16 %v1064, %v1064
    %vm1081 = vcmask 388096
    %1082 = vst.msk [vmem:[%s9] sm:$0xf] %vm1081, %v1065
    %1083 = vst.msk [vmem:[%s9 + $0x4] sm:$0xf] %vm1081, %v1066
    %1084 = vst.msk [vmem:[%s9 + $0x8] sm:$0xf] %vm1081, %v1067
    %1085 = vst.msk [vmem:[%s9 + $0xc] sm:$0xf] %vm1081, %v1068
    %1086 = vst.msk [vmem:[%s9 + $0x10] sm:$0xf] %vm1081, %v1069
    %1087 = vst.msk [vmem:[%s9 + $0x14] sm:$0xf] %vm1081, %v1070
    %1088 = vst.msk [vmem:[%s9 + $0x18] sm:$0xf] %vm1081, %v1071
    %1089 = vst.msk [vmem:[%s9 + $0x1c] sm:$0xf] %vm1081, %v1072
    %v1090 = vld [vmem:[%s5] sm:$0xff]
    %v1091 = vld [vmem:[%s5 + $0x8] sm:$0xff]
    %v1092 = vld [vmem:[%s5 + $0x10] sm:$0xff]
    %v1093 = vld [vmem:[%s5 + $0x18] sm:$0xff]
    %v1094 = vld [vmem:[%s5 + $0x20] sm:$0xff]
    %v1095 = vld [vmem:[%s5 + $0x28] sm:$0xff]
    %v1096 = vld [vmem:[%s8] ss:$8 sm:$0x3]
    %v1098 = vlaneseq
    %v1099 = vshrl.u32 %v1098, 7
    %v1100 = vsub.s32 0, %v1099
    %v1101 = vrot.slane %v1096, %v1100
    %v1102 = vlaneseq
    %v1103 = vshrl.u32 %v1102, 7
    %v1104 = vsub.s32 1, %v1103
    %v1105 = vrot.slane %v1096, %v1104
    %v1114 = vunpack.c.l.b16 %v1090
    %v1115 = vunpack.c.h.b16 %v1090
    %v1116 = vunpack.c.l.b16 %v1091
    %v1117 = vunpack.c.h.b16 %v1091
    %v1118 = vunpack.c.l.b16 %v1092
    %v1119 = vunpack.c.h.b16 %v1092
    %v1120 = vunpack.c.l.b16 %v1093
    %v1121 = vunpack.c.h.b16 %v1093
    %v1122 = vunpack.c.l.b16 %v1094
    %v1123 = vunpack.c.h.b16 %v1094
    %v1124 = vunpack.c.l.b16 %v1095
    %v1125 = vunpack.c.h.b16 %v1095
    %v1126 = vpack.c.b16 %v1116, %v1114
    %v1127 = vpack.c.b16 %v1117, %v1115
    %v1128 = vpack.c.b16 %v1120, %v1118
    %v1129 = vpack.c.b16 %v1121, %v1119
    %v1130 = vpack.c.b16 %v1124, %v1122
    %v1131 = vpack.c.b16 %v1125, %v1123
    %vm1138 = vcmask 392192
    %v1140 = vsel %vm1138, %v1049, 0
    %v1143 = vsel %vm1138, %v1050, 0
    %v1146 = vsel %vm1138, %v1051, 0
    %v1149 = vsel %vm1138, %v1052, 0
    %1151 = vmatprep.subr.bf16.mxu0 %v1127
    %1152 = vmatpush1.bf16.msra.mxu0 %v1126
    %1153 = vmatprep.subr.bf16.mxu0 %v1129
    %1154 = vmatpush1.bf16.msra.mxu0 %v1128
    %1155 = vmatprep.subr.bf16.mxu0 %v1131
    %1156 = vmatpush1.bf16.msra.mxu0 %v1130
    %1157 = vmatprep.subr.bf16.mxu0 0
    %1158 = vmatpush1.bf16.msra.mxu0 0
    %1159 = vmatprep.subr.bf16.mxu0 0
    %1160 = vmatpush1.bf16.msra.mxu0 0
    %1161 = vmatprep.subr.bf16.mxu0 0
    %1162 = vmatpush1.bf16.msra.mxu0 0
    %1163 = vmatprep.subr.bf16.mxu0 0
    %1164 = vmatpush1.bf16.msra.mxu0 0
    %1165 = vmatprep.subr.bf16.mxu0 0
    %1166 = vmatpush1.bf16.msra.mxu0 0
    %1167 = vmatprep.subr.bf16.mxu0 0
    %1168 = vmatpush1.bf16.msra.mxu0 0
    %1169 = vmatprep.subr.bf16.mxu0 0
    %1170 = vmatpush1.bf16.msra.mxu0 0
    %1171 = vmatprep.subr.bf16.mxu0 0
    %1172 = vmatpush1.bf16.msra.mxu0 0
    %1173 = vmatprep.subr.bf16.mxu0 0
    %1174 = vmatpush1.bf16.msra.mxu0 0
    %1175 = vmatprep.subr.bf16.mxu0 0
    %1176 = vmatpush1.bf16.msra.mxu0 0
    %1177 = vmatprep.subr.bf16.mxu0 0
    %1178 = vmatpush1.bf16.msra.mxu0 0
    %1179 = vmatprep.subr.bf16.mxu0 0
    %1180 = vmatpush1.bf16.msra.mxu0 0
    %1181 = vmatprep.subr.bf16.mxu0 0
    %1182 = vmatpush1.bf16.msra.mxu0 0
    %1183 = vmatprep.mubr.bf16.mxu0 0
    %1184 = vmatmul.mubr.bf16.gmra.mrb[0].mxu0 %v1140
    %v1185 = vpop.f32.mrb[0].mxu0
    %v1186 = vadd.f32 %v1101, %v1185
    %v1187 = vpop.f32.mrb[0].mxu0
    %v1188 = vadd.f32 %v1105, %v1187
    %v1189 = vpop.f32.mrb[0].mxu0
    %v1190 = vadd.f32 %v1101, %v1189
    %v1191 = vpop.f32.mrb[0].mxu0
    %v1192 = vadd.f32 %v1105, %v1191
    %1193 = vmatprep.mubr.bf16.mxu0 0
    %1194 = vmatmul.mubr.bf16.gmra.mrb[0].mxu0 %v1143
    %v1195 = vpop.f32.mrb[0].mxu0
    %v1196 = vadd.f32 %v1101, %v1195
    %v1197 = vpop.f32.mrb[0].mxu0
    %v1198 = vadd.f32 %v1105, %v1197
    %v1199 = vpop.f32.mrb[0].mxu0
    %v1200 = vadd.f32 %v1101, %v1199
    %v1201 = vpop.f32.mrb[0].mxu0
    %v1202 = vadd.f32 %v1105, %v1201
    %1203 = vmatprep.mubr.bf16.mxu0 0
    %1204 = vmatmul.mubr.bf16.gmra.mrb[0].mxu0 %v1146
    %v1205 = vpop.f32.mrb[0].mxu0
    %v1206 = vadd.f32 %v1101, %v1205
    %v1207 = vpop.f32.mrb[0].mxu0
    %v1208 = vadd.f32 %v1105, %v1207
    %v1209 = vpop.f32.mrb[0].mxu0
    %v1210 = vadd.f32 %v1101, %v1209
    %v1211 = vpop.f32.mrb[0].mxu0
    %v1212 = vadd.f32 %v1105, %v1211
    %1213 = vmatprep.mubr.bf16.mxu0 0
    %1214 = vmatmul.mubr.bf16.gmra.mrb[0].mxu0 %v1149
    %v1215 = vpop.f32.mrb[0].mxu0
    %v1216 = vadd.f32 %v1101, %v1215
    %v1217 = vpop.f32.mrb[0].mxu0
    %v1218 = vadd.f32 %v1105, %v1217
    %v1219 = vpop.f32.mrb[0].mxu0
    %v1220 = vadd.f32 %v1101, %v1219
    %v1221 = vpop.f32.mrb[0].mxu0
    %v1222 = vadd.f32 %v1105, %v1221
    %1223 = vdwg.mxu0
    %v1224 = vmax.f32 %v1186, 0.0
    %v1225 = vmax.f32 %v1188, 0.0
    %v1226 = vmax.f32 %v1190, 0.0
    %v1227 = vmax.f32 %v1192, 0.0
    %v1228 = vmax.f32 %v1196, 0.0
    %v1229 = vmax.f32 %v1198, 0.0
    %v1230 = vmax.f32 %v1200, 0.0
    %v1231 = vmax.f32 %v1202, 0.0
    %v1232 = vmax.f32 %v1206, 0.0
    %v1233 = vmax.f32 %v1208, 0.0
    %v1234 = vmax.f32 %v1210, 0.0
    %v1235 = vmax.f32 %v1212, 0.0
    %v1236 = vmax.f32 %v1216, 0.0
    %v1237 = vmax.f32 %v1218, 0.0
    %v1238 = vmax.f32 %v1220, 0.0
    %v1239 = vmax.f32 %v1222, 0.0
    %v1240 = vld [vmem:[#allocation5] sm:$0xff]
    %v1241 = vld [vmem:[#allocation5 + $0x8] sm:$0xff]
    %v1242 = vld [vmem:[#allocation5 + $0x10] sm:$0xff]
    %v1243 = vld [vmem:[#allocation5 + $0x18] sm:$0xff]
    %v1244 = vld [vmem:[#allocation5 + $0x20] sm:$0xff]
    %v1245 = vld [vmem:[#allocation5 + $0x28] sm:$0xff]
    %v1246 = vld [vmem:[#allocation5 + $0x30] sm:$0xff]
    %v1247 = vld [vmem:[#allocation5 + $0x38] sm:$0xff]
    %v1248 = vld [vmem:[#allocation5 + $0x40] sm:$0xff]
    %v1249 = vld [vmem:[#allocation5 + $0x48] sm:$0xff]
    %v1250 = vld [vmem:[#allocation5 + $0x50] sm:$0xff]
    %v1251 = vld [vmem:[#allocation5 + $0x58] sm:$0xff]
    %v1252 = vld [vmem:[#allocation5 + $0x60] sm:$0xff]
    %v1253 = vld [vmem:[#allocation5 + $0x68] sm:$0xff]
    %v1254 = vld [vmem:[#allocation5 + $0x70] sm:$0xff]
    %v1255 = vld [vmem:[#allocation5 + $0x78] sm:$0xff]
    %v1256 = vld [vmem:[#allocation5 + $0x80] sm:$0xff]
    %v1257 = vld [vmem:[#allocation5 + $0x88] sm:$0xff]
    %v1258 = vld [vmem:[#allocation5 + $0x90] sm:$0xff]
    %v1259 = vld [vmem:[#allocation5 + $0x98] sm:$0xff]
    %v1260 = vld [vmem:[#allocation5 + $0xa0] sm:$0xff]
    %v1261 = vld [vmem:[#allocation5 + $0xa8] sm:$0xff]
    %v1262 = vld [vmem:[#allocation5 + $0xb0] sm:$0xff]
    %v1263 = vld [vmem:[#allocation5 + $0xb8] sm:$0xff]
    %v1264 = vld [vmem:[#allocation5 + $0xc0] sm:$0xff]
    %v1265 = vld [vmem:[#allocation5 + $0xc8] sm:$0xff]
    %v1266 = vld [vmem:[#allocation5 + $0xd0] sm:$0xff]
    %v1267 = vld [vmem:[#allocation5 + $0xd8] sm:$0xff]
    %v1268 = vld [vmem:[#allocation5 + $0xe0] sm:$0xff]
    %v1269 = vld [vmem:[#allocation5 + $0xe8] sm:$0xff]
    %v1270 = vld [vmem:[#allocation5 + $0xf0] sm:$0xff]
    %v1271 = vld [vmem:[#allocation5 + $0xf8] sm:$0xff]
    %v1272 = vpack.c.bf16 %v1226, %v1224
    %v1273 = vpack.c.bf16 %v1227, %v1225
    %v1274 = vpack.c.bf16 %v1230, %v1228
    %v1275 = vpack.c.bf16 %v1231, %v1229
    %v1276 = vpack.c.bf16 %v1234, %v1232
    %v1277 = vpack.c.bf16 %v1235, %v1233
    %v1278 = vpack.c.bf16 %v1238, %v1236
    %v1279 = vpack.c.bf16 %v1239, %v1237
    %s1280 = scalar_lea.vmem %s8, 1
    %v1281 = vld [vmem:[%s1280] ss:$8 sm:$0x3]
    %v1283 = vlaneseq
    %v1284 = vshrl.u32 %v1283, 7
    %v1285 = vsub.s32 0, %v1284
    %v1286 = vrot.slane %v1281, %v1285
    %v1287 = vlaneseq
    %v1288 = vshrl.u32 %v1287, 7
    %v1289 = vsub.s32 1, %v1288
    %v1290 = vrot.slane %v1281, %v1289
    %v1325 = vunpack.c.l.b16 %v1240
    %v1326 = vunpack.c.h.b16 %v1240
    %v1327 = vunpack.c.l.b16 %v1241
    %v1328 = vunpack.c.h.b16 %v1241
    %v1329 = vunpack.c.l.b16 %v1242
    %v1330 = vunpack.c.h.b16 %v1242
    %v1331 = vunpack.c.l.b16 %v1243
    %v1332 = vunpack.c.h.b16 %v1243
    %v1333 = vunpack.c.l.b16 %v1244
    %v1334 = vunpack.c.h.b16 %v1244
    %v1335 = vunpack.c.l.b16 %v1245
    %v1336 = vunpack.c.h.b16 %v1245
    %v1337 = vunpack.c.l.b16 %v1246
    %v1338 = vunpack.c.h.b16 %v1246
    %v1339 = vunpack.c.l.b16 %v1247
    %v1340 = vunpack.c.h.b16 %v1247
    %v1341 = vunpack.c.l.b16 %v1248
    %v1342 = vunpack.c.h.b16 %v1248
    %v1343 = vunpack.c.l.b16 %v1249
    %v1344 = vunpack.c.h.b16 %v1249
    %v1345 = vunpack.c.l.b16 %v1250
    %v1346 = vunpack.c.h.b16 %v1250
    %v1347 = vunpack.c.l.b16 %v1251
    %v1348 = vunpack.c.h.b16 %v1251
    %v1349 = vunpack.c.l.b16 %v1252
    %v1350 = vunpack.c.h.b16 %v1252
    %v1351 = vunpack.c.l.b16 %v1253
    %v1352 = vunpack.c.h.b16 %v1253
    %v1353 = vunpack.c.l.b16 %v1254
    %v1354 = vunpack.c.h.b16 %v1254
    %v1355 = vunpack.c.l.b16 %v1255
    %v1356 = vunpack.c.h.b16 %v1255
    %v1357 = vunpack.c.l.b16 %v1256
    %v1358 = vunpack.c.h.b16 %v1256
    %v1359 = vunpack.c.l.b16 %v1257
    %v1360 = vunpack.c.h.b16 %v1257
    %v1361 = vunpack.c.l.b16 %v1258
    %v1362 = vunpack.c.h.b16 %v1258
    %v1363 = vunpack.c.l.b16 %v1259
    %v1364 = vunpack.c.h.b16 %v1259
    %v1365 = vunpack.c.l.b16 %v1260
    %v1366 = vunpack.c.h.b16 %v1260
    %v1367 = vunpack.c.l.b16 %v1261
    %v1368 = vunpack.c.h.b16 %v1261
    %v1369 = vunpack.c.l.b16 %v1262
    %v1370 = vunpack.c.h.b16 %v1262
    %v1371 = vunpack.c.l.b16 %v1263
    %v1372 = vunpack.c.h.b16 %v1263
    %v1373 = vunpack.c.l.b16 %v1264
    %v1374 = vunpack.c.h.b16 %v1264
    %v1375 = vunpack.c.l.b16 %v1265
    %v1376 = vunpack.c.h.b16 %v1265
    %v1377 = vunpack.c.l.b16 %v1266
    %v1378 = vunpack.c.h.b16 %v1266
    %v1379 = vunpack.c.l.b16 %v1267
    %v1380 = vunpack.c.h.b16 %v1267
    %v1381 = vunpack.c.l.b16 %v1268
    %v1382 = vunpack.c.h.b16 %v1268
    %v1383 = vunpack.c.l.b16 %v1269
    %v1384 = vunpack.c.h.b16 %v1269
    %v1385 = vunpack.c.l.b16 %v1270
    %v1386 = vunpack.c.h.b16 %v1270
    %v1387 = vunpack.c.l.b16 %v1271
    %v1388 = vunpack.c.h.b16 %v1271
    %v1389 = vpack.c.b16 %v1327, %v1325
    %v1390 = vpack.c.b16 %v1328, %v1326
    %v1391 = vpack.c.b16 %v1331, %v1329
    %v1392 = vpack.c.b16 %v1332, %v1330
    %v1393 = vpack.c.b16 %v1335, %v1333
    %v1394 = vpack.c.b16 %v1336, %v1334
    %v1395 = vpack.c.b16 %v1339, %v1337
    %v1396 = vpack.c.b16 %v1340, %v1338
    %v1397 = vpack.c.b16 %v1343, %v1341
    %v1398 = vpack.c.b16 %v1344, %v1342
    %v1399 = vpack.c.b16 %v1347, %v1345
    %v1400 = vpack.c.b16 %v1348, %v1346
    %v1401 = vpack.c.b16 %v1351, %v1349
    %v1402 = vpack.c.b16 %v1352, %v1350
    %v1403 = vpack.c.b16 %v1355, %v1353
    %v1404 = vpack.c.b16 %v1356, %v1354
    %v1405 = vpack.c.b16 %v1359, %v1357
    %v1406 = vpack.c.b16 %v1360, %v1358
    %v1407 = vpack.c.b16 %v1363, %v1361
    %v1408 = vpack.c.b16 %v1364, %v1362
    %v1409 = vpack.c.b16 %v1367, %v1365
    %v1410 = vpack.c.b16 %v1368, %v1366
    %v1411 = vpack.c.b16 %v1371, %v1369
    %v1412 = vpack.c.b16 %v1372, %v1370
    %v1413 = vpack.c.b16 %v1375, %v1373
    %v1414 = vpack.c.b16 %v1376, %v1374
    %v1415 = vpack.c.b16 %v1379, %v1377
    %v1416 = vpack.c.b16 %v1380, %v1378
    %v1417 = vpack.c.b16 %v1383, %v1381
    %v1418 = vpack.c.b16 %v1384, %v1382
    %v1419 = vpack.c.b16 %v1387, %v1385
    %v1420 = vpack.c.b16 %v1388, %v1386
    %1453 = vmatprep.subr.bf16.mxu0 %v1390
    %1454 = vmatpush1.bf16.msra.mxu0 %v1389
    %1455 = vmatprep.subr.bf16.mxu0 %v1392
    %1456 = vmatpush1.bf16.msra.mxu0 %v1391
    %1457 = vmatprep.subr.bf16.mxu0 %v1394
    %1458 = vmatpush1.bf16.msra.mxu0 %v1393
    %1459 = vmatprep.subr.bf16.mxu0 %v1396
    %1460 = vmatpush1.bf16.msra.mxu0 %v1395
    %1461 = vmatprep.subr.bf16.mxu0 %v1398
    %1462 = vmatpush1.bf16.msra.mxu0 %v1397
    %1463 = vmatprep.subr.bf16.mxu0 %v1400
    %1464 = vmatpush1.bf16.msra.mxu0 %v1399
    %1465 = vmatprep.subr.bf16.mxu0 %v1402
    %1466 = vmatpush1.bf16.msra.mxu0 %v1401
    %1467 = vmatprep.subr.bf16.mxu0 %v1404
    %1468 = vmatpush1.bf16.msra.mxu0 %v1403
    %1469 = vmatprep.subr.bf16.mxu0 %v1406
    %1470 = vmatpush1.bf16.msra.mxu0 %v1405
    %1471 = vmatprep.subr.bf16.mxu0 %v1408
    %1472 = vmatpush1.bf16.msra.mxu0 %v1407
    %1473 = vmatprep.subr.bf16.mxu0 %v1410
    %1474 = vmatpush1.bf16.msra.mxu0 %v1409
    %1475 = vmatprep.subr.bf16.mxu0 %v1412
    %1476 = vmatpush1.bf16.msra.mxu0 %v1411
    %1477 = vmatprep.subr.bf16.mxu0 %v1414
    %1478 = vmatpush1.bf16.msra.mxu0 %v1413
    %1479 = vmatprep.subr.bf16.mxu0 %v1416
    %1480 = vmatpush1.bf16.msra.mxu0 %v1415
    %1481 = vmatprep.subr.bf16.mxu0 %v1418
    %1482 = vmatpush1.bf16.msra.mxu0 %v1417
    %1483 = vmatprep.subr.bf16.mxu0 %v1420
    %1484 = vmatpush1.bf16.msra.mxu0 %v1419
    %1485 = vmatprep.mubr.bf16.mxu0 %v1273
    %1486 = vmatmul.mubr.bf16.gmra.mrb[0].mxu0 %v1272
    %v1487 = vpop.f32.mrb[0].mxu0
    %v1488 = vadd.f32 %v1286, %v1487
    %v1489 = vpop.f32.mrb[0].mxu0
    %v1490 = vadd.f32 %v1290, %v1489
    %v1491 = vpop.f32.mrb[0].mxu0
    %v1492 = vadd.f32 %v1286, %v1491
    %v1493 = vpop.f32.mrb[0].mxu0
    %v1494 = vadd.f32 %v1290, %v1493
    %1495 = vmatprep.mubr.bf16.mxu0 %v1275
    %1496 = vmatmul.mubr.bf16.gmra.mrb[0].mxu0 %v1274
    %v1497 = vpop.f32.mrb[0].mxu0
    %v1498 = vadd.f32 %v1286, %v1497
    %v1499 = vpop.f32.mrb[0].mxu0
    %v1500 = vadd.f32 %v1290, %v1499
    %v1501 = vpop.f32.mrb[0].mxu0
    %v1502 = vadd.f32 %v1286, %v1501
    %v1503 = vpop.f32.mrb[0].mxu0
    %v1504 = vadd.f32 %v1290, %v1503
    %1505 = vmatprep.mubr.bf16.mxu0 %v1277
    %1506 = vmatmul.mubr.bf16.gmra.mrb[0].mxu0 %v1276
    %v1507 = vpop.f32.mrb[0].mxu0
    %v1508 = vadd.f32 %v1286, %v1507
    %v1509 = vpop.f32.mrb[0].mxu0
    %v1510 = vadd.f32 %v1290, %v1509
    %v1511 = vpop.f32.mrb[0].mxu0
    %v1512 = vadd.f32 %v1286, %v1511
    %v1513 = vpop.f32.mrb[0].mxu0
    %v1514 = vadd.f32 %v1290, %v1513
    %1515 = vmatprep.mubr.bf16.mxu0 %v1279
    %1516 = vmatmul.mubr.bf16.gmra.mrb[0].mxu0 %v1278
    %v1517 = vpop.f32.mrb[0].mxu0
    %v1518 = vadd.f32 %v1286, %v1517
    %v1519 = vpop.f32.mrb[0].mxu0
    %v1520 = vadd.f32 %v1290, %v1519
    %v1521 = vpop.f32.mrb[0].mxu0
    %v1522 = vadd.f32 %v1286, %v1521
    %v1523 = vpop.f32.mrb[0].mxu0
    %v1524 = vadd.f32 %v1290, %v1523
    %1525 = vdwg.mxu0
    %v1526 = vmax.f32 %v1488, 0.0
    %v1527 = vmax.f32 %v1490, 0.0
    %v1528 = vmax.f32 %v1492, 0.0
    %v1529 = vmax.f32 %v1494, 0.0
    %v1530 = vmax.f32 %v1498, 0.0
    %v1531 = vmax.f32 %v1500, 0.0
    %v1532 = vmax.f32 %v1502, 0.0
    %v1533 = vmax.f32 %v1504, 0.0
    %v1534 = vmax.f32 %v1508, 0.0
    %v1535 = vmax.f32 %v1510, 0.0
    %v1536 = vmax.f32 %v1512, 0.0
    %v1537 = vmax.f32 %v1514, 0.0
    %v1538 = vmax.f32 %v1518, 0.0
    %v1539 = vmax.f32 %v1520, 0.0
    %v1540 = vmax.f32 %v1522, 0.0
    %v1541 = vmax.f32 %v1524, 0.0
    %s1542 = scalar_lea.vmem [#allocation5], 256
    %v1543 = vld [vmem:[%s1542] sm:$0xff]
    %v1544 = vld [vmem:[%s1542 + $0x8] sm:$0xff]
    %v1545 = vld [vmem:[%s1542 + $0x10] sm:$0xff]
    %v1546 = vld [vmem:[%s1542 + $0x18] sm:$0xff]
    %v1547 = vld [vmem:[%s1542 + $0x20] sm:$0xff]
    %v1548 = vld [vmem:[%s1542 + $0x28] sm:$0xff]
    %v1549 = vld [vmem:[%s1542 + $0x30] sm:$0xff]
    %v1550 = vld [vmem:[%s1542 + $0x38] sm:$0xff]
    %v1551 = vld [vmem:[%s1542 + $0x40] sm:$0xff]
    %v1552 = vld [vmem:[%s1542 + $0x48] sm:$0xff]
    %v1553 = vld [vmem:[%s1542 + $0x50] sm:$0xff]
    %v1554 = vld [vmem:[%s1542 + $0x58] sm:$0xff]
    %v1555 = vld [vmem:[%s1542 + $0x60] sm:$0xff]
    %v1556 = vld [vmem:[%s1542 + $0x68] sm:$0xff]
    %v1557 = vld [vmem:[%s1542 + $0x70] sm:$0xff]
    %v1558 = vld [vmem:[%s1542 + $0x78] sm:$0xff]
    %v1559 = vld [vmem:[%s1542 + $0x80] sm:$0xff]
    %v1560 = vld [vmem:[%s1542 + $0x88] sm:$0xff]
    %v1561 = vld [vmem:[%s1542 + $0x90] sm:$0xff]
    %v1562 = vld [vmem:[%s1542 + $0x98] sm:$0xff]
    %v1563 = vld [vmem:[%s1542 + $0xa0] sm:$0xff]
    %v1564 = vld [vmem:[%s1542 + $0xa8] sm:$0xff]
    %v1565 = vld [vmem:[%s1542 + $0xb0] sm:$0xff]
    %v1566 = vld [vmem:[%s1542 + $0xb8] sm:$0xff]
    %v1567 = vld [vmem:[%s1542 + $0xc0] sm:$0xff]
    %v1568 = vld [vmem:[%s1542 + $0xc8] sm:$0xff]
    %v1569 = vld [vmem:[%s1542 + $0xd0] sm:$0xff]
    %v1570 = vld [vmem:[%s1542 + $0xd8] sm:$0xff]
    %v1571 = vld [vmem:[%s1542 + $0xe0] sm:$0xff]
    %v1572 = vld [vmem:[%s1542 + $0xe8] sm:$0xff]
    %v1573 = vld [vmem:[%s1542 + $0xf0] sm:$0xff]
    %v1574 = vld [vmem:[%s1542 + $0xf8] sm:$0xff]
    %v1575 = vpack.c.bf16 %v1528, %v1526
    %v1576 = vpack.c.bf16 %v1529, %v1527
    %v1577 = vpack.c.bf16 %v1532, %v1530
    %v1578 = vpack.c.bf16 %v1533, %v1531
    %v1579 = vpack.c.bf16 %v1536, %v1534
    %v1580 = vpack.c.bf16 %v1537, %v1535
    %v1581 = vpack.c.bf16 %v1540, %v1538
    %v1582 = vpack.c.bf16 %v1541, %v1539
    %s1583 = scalar_lea.vmem %s8, 2
    %v1584 = vld [vmem:[%s1583] ss:$8 sm:$0x3]
    %v1586 = vlaneseq
    %v1587 = vshrl.u32 %v1586, 7
    %v1588 = vsub.s32 0, %v1587
    %v1589 = vrot.slane %v1584, %v1588
    %v1590 = vlaneseq
    %v1591 = vshrl.u32 %v1590, 7
    %v1592 = vsub.s32 1, %v1591
    %v1593 = vrot.slane %v1584, %v1592
    %v1628 = vunpack.c.l.b16 %v1543
    %v1629 = vunpack.c.h.b16 %v1543
    %v1630 = vunpack.c.l.b16 %v1544
    %v1631 = vunpack.c.h.b16 %v1544
    %v1632 = vunpack.c.l.b16 %v1545
    %v1633 = vunpack.c.h.b16 %v1545
    %v1634 = vunpack.c.l.b16 %v1546
    %v1635 = vunpack.c.h.b16 %v1546
    %v1636 = vunpack.c.l.b16 %v1547
    %v1637 = vunpack.c.h.b16 %v1547
    %v1638 = vunpack.c.l.b16 %v1548
    %v1639 = vunpack.c.h.b16 %v1548
    %v1640 = vunpack.c.l.b16 %v1549
    %v1641 = vunpack.c.h.b16 %v1549
    %v1642 = vunpack.c.l.b16 %v1550
    %v1643 = vunpack.c.h.b16 %v1550
    %v1644 = vunpack.c.l.b16 %v1551
    %v1645 = vunpack.c.h.b16 %v1551
    %v1646 = vunpack.c.l.b16 %v1552
    %v1647 = vunpack.c.h.b16 %v1552
    %v1648 = vunpack.c.l.b16 %v1553
    %v1649 = vunpack.c.h.b16 %v1553
    %v1650 = vunpack.c.l.b16 %v1554
    %v1651 = vunpack.c.h.b16 %v1554
    %v1652 = vunpack.c.l.b16 %v1555
    %v1653 = vunpack.c.h.b16 %v1555
    %v1654 = vunpack.c.l.b16 %v1556
    %v1655 = vunpack.c.h.b16 %v1556
    %v1656 = vunpack.c.l.b16 %v1557
    %v1657 = vunpack.c.h.b16 %v1557
    %v1658 = vunpack.c.l.b16 %v1558
    %v1659 = vunpack.c.h.b16 %v1558
    %v1660 = vunpack.c.l.b16 %v1559
    %v1661 = vunpack.c.h.b16 %v1559
    %v1662 = vunpack.c.l.b16 %v1560
    %v1663 = vunpack.c.h.b16 %v1560
    %v1664 = vunpack.c.l.b16 %v1561
    %v1665 = vunpack.c.h.b16 %v1561
    %v1666 = vunpack.c.l.b16 %v1562
    %v1667 = vunpack.c.h.b16 %v1562
    %v1668 = vunpack.c.l.b16 %v1563
    %v1669 = vunpack.c.h.b16 %v1563
    %v1670 = vunpack.c.l.b16 %v1564
    %v1671 = vunpack.c.h.b16 %v1564
    %v1672 = vunpack.c.l.b16 %v1565
    %v1673 = vunpack.c.h.b16 %v1565
    %v1674 = vunpack.c.l.b16 %v1566
    %v1675 = vunpack.c.h.b16 %v1566
    %v1676 = vunpack.c.l.b16 %v1567
    %v1677 = vunpack.c.h.b16 %v1567
    %v1678 = vunpack.c.l.b16 %v1568
    %v1679 = vunpack.c.h.b16 %v1568
    %v1680 = vunpack.c.l.b16 %v1569
    %v1681 = vunpack.c.h.b16 %v1569
    %v1682 = vunpack.c.l.b16 %v1570
    %v1683 = vunpack.c.h.b16 %v1570
    %v1684 = vunpack.c.l.b16 %v1571
    %v1685 = vunpack.c.h.b16 %v1571
    %v1686 = vunpack.c.l.b16 %v1572
    %v1687 = vunpack.c.h.b16 %v1572
    %v1688 = vunpack.c.l.b16 %v1573
    %v1689 = vunpack.c.h.b16 %v1573
    %v1690 = vunpack.c.l.b16 %v1574
    %v1691 = vunpack.c.h.b16 %v1574
    %v1692 = vpack.c.b16 %v1630, %v1628
    %v1693 = vpack.c.b16 %v1631, %v1629
    %v1694 = vpack.c.b16 %v1634, %v1632
    %v1695 = vpack.c.b16 %v1635, %v1633
    %v1696 = vpack.c.b16 %v1638, %v1636
    %v1697 = vpack.c.b16 %v1639, %v1637
    %v1698 = vpack.c.b16 %v1642, %v1640
    %v1699 = vpack.c.b16 %v1643, %v1641
    %v1700 = vpack.c.b16 %v1646, %v1644
    %v1701 = vpack.c.b16 %v1647, %v1645
    %v1702 = vpack.c.b16 %v1650, %v1648
    %v1703 = vpack.c.b16 %v1651, %v1649
    %v1704 = vpack.c.b16 %v1654, %v1652
    %v1705 = vpack.c.b16 %v1655, %v1653
    %v1706 = vpack.c.b16 %v1658, %v1656
    %v1707 = vpack.c.b16 %v1659, %v1657
    %v1708 = vpack.c.b16 %v1662, %v1660
    %v1709 = vpack.c.b16 %v1663, %v1661
    %v1710 = vpack.c.b16 %v1666, %v1664
    %v1711 = vpack.c.b16 %v1667, %v1665
    %v1712 = vpack.c.b16 %v1670, %v1668
    %v1713 = vpack.c.b16 %v1671, %v1669
    %v1714 = vpack.c.b16 %v1674, %v1672
    %v1715 = vpack.c.b16 %v1675, %v1673
    %v1716 = vpack.c.b16 %v1678, %v1676
    %v1717 = vpack.c.b16 %v1679, %v1677
    %v1718 = vpack.c.b16 %v1682, %v1680
    %v1719 = vpack.c.b16 %v1683, %v1681
    %v1720 = vpack.c.b16 %v1686, %v1684
    %v1721 = vpack.c.b16 %v1687, %v1685
    %v1722 = vpack.c.b16 %v1690, %v1688
    %v1723 = vpack.c.b16 %v1691, %v1689
    %1756 = vmatprep.subr.bf16.mxu0 %v1693
    %1757 = vmatpush1.bf16.msra.mxu0 %v1692
    %1758 = vmatprep.subr.bf16.mxu0 %v1695
    %1759 = vmatpush1.bf16.msra.mxu0 %v1694
    %1760 = vmatprep.subr.bf16.mxu0 %v1697
    %1761 = vmatpush1.bf16.msra.mxu0 %v1696
    %1762 = vmatprep.subr.bf16.mxu0 %v1699
    %1763 = vmatpush1.bf16.msra.mxu0 %v1698
    %1764 = vmatprep.subr.bf16.mxu0 %v1701
    %1765 = vmatpush1.bf16.msra.mxu0 %v1700
    %1766 = vmatprep.subr.bf16.mxu0 %v1703
    %1767 = vmatpush1.bf16.msra.mxu0 %v1702
    %1768 = vmatprep.subr.bf16.mxu0 %v1705
    %1769 = vmatpush1.bf16.msra.mxu0 %v1704
    %1770 = vmatprep.subr.bf16.mxu0 %v1707
    %1771 = vmatpush1.bf16.msra.mxu0 %v1706
    %1772 = vmatprep.subr.bf16.mxu0 %v1709
    %1773 = vmatpush1.bf16.msra.mxu0 %v1708
    %1774 = vmatprep.subr.bf16.mxu0 %v1711
    %1775 = vmatpush1.bf16.msra.mxu0 %v1710
    %1776 = vmatprep.subr.bf16.mxu0 %v1713
    %1777 = vmatpush1.bf16.msra.mxu0 %v1712
    %1778 = vmatprep.subr.bf16.mxu0 %v1715
    %1779 = vmatpush1.bf16.msra.mxu0 %v1714
    %1780 = vmatprep.subr.bf16.mxu0 %v1717
    %1781 = vmatpush1.bf16.msra.mxu0 %v1716
    %1782 = vmatprep.subr.bf16.mxu0 %v1719
    %1783 = vmatpush1.bf16.msra.mxu0 %v1718
    %1784 = vmatprep.subr.bf16.mxu0 %v1721
    %1785 = vmatpush1.bf16.msra.mxu0 %v1720
    %1786 = vmatprep.subr.bf16.mxu0 %v1723
    %1787 = vmatpush1.bf16.msra.mxu0 %v1722
    %1788 = vmatprep.mubr.bf16.mxu0 %v1576
    %1789 = vmatmul.mubr.bf16.gmra.mrb[0].mxu0 %v1575
    %v1790 = vpop.f32.mrb[0].mxu0
    %v1791 = vadd.f32 %v1589, %v1790
    %v1792 = vpop.f32.mrb[0].mxu0
    %v1793 = vadd.f32 %v1593, %v1792
    %v1794 = vpop.f32.mrb[0].mxu0
    %v1795 = vadd.f32 %v1589, %v1794
    %v1796 = vpop.f32.mrb[0].mxu0
    %v1797 = vadd.f32 %v1593, %v1796
    %1798 = vmatprep.mubr.bf16.mxu0 %v1578
    %1799 = vmatmul.mubr.bf16.gmra.mrb[0].mxu0 %v1577
    %v1800 = vpop.f32.mrb[0].mxu0
    %v1801 = vadd.f32 %v1589, %v1800
    %v1802 = vpop.f32.mrb[0].mxu0
    %v1803 = vadd.f32 %v1593, %v1802
    %v1804 = vpop.f32.mrb[0].mxu0
    %v1805 = vadd.f32 %v1589, %v1804
    %v1806 = vpop.f32.mrb[0].mxu0
    %v1807 = vadd.f32 %v1593, %v1806
    %1808 = vmatprep.mubr.bf16.mxu0 %v1580
    %1809 = vmatmul.mubr.bf16.gmra.mrb[0].mxu0 %v1579
    %v1810 = vpop.f32.mrb[0].mxu0
    %v1811 = vadd.f32 %v1589, %v1810
    %v1812 = vpop.f32.mrb[0].mxu0
    %v1813 = vadd.f32 %v1593, %v1812
    %v1814 = vpop.f32.mrb[0].mxu0
    %v1815 = vadd.f32 %v1589, %v1814
    %v1816 = vpop.f32.mrb[0].mxu0
    %v1817 = vadd.f32 %v1593, %v1816
    %1818 = vmatprep.mubr.bf16.mxu0 %v1582
    %1819 = vmatmul.mubr.bf16.gmra.mrb[0].mxu0 %v1581
    %v1820 = vpop.f32.mrb[0].mxu0
    %v1821 = vadd.f32 %v1589, %v1820
    %v1822 = vpop.f32.mrb[0].mxu0
    %v1823 = vadd.f32 %v1593, %v1822
    %v1824 = vpop.f32.mrb[0].mxu0
    %v1825 = vadd.f32 %v1589, %v1824
    %v1826 = vpop.f32.mrb[0].mxu0
    %v1827 = vadd.f32 %v1593, %v1826
    %1828 = vdwg.mxu0
    %v1829 = vmax.f32 %v1791, 0.0
    %v1830 = vmax.f32 %v1793, 0.0
    %v1831 = vmax.f32 %v1795, 0.0
    %v1832 = vmax.f32 %v1797, 0.0
    %v1833 = vmax.f32 %v1801, 0.0
    %v1834 = vmax.f32 %v1803, 0.0
    %v1835 = vmax.f32 %v1805, 0.0
    %v1836 = vmax.f32 %v1807, 0.0
    %v1837 = vmax.f32 %v1811, 0.0
    %v1838 = vmax.f32 %v1813, 0.0
    %v1839 = vmax.f32 %v1815, 0.0
    %v1840 = vmax.f32 %v1817, 0.0
    %v1841 = vmax.f32 %v1821, 0.0
    %v1842 = vmax.f32 %v1823, 0.0
    %v1843 = vmax.f32 %v1825, 0.0
    %v1844 = vmax.f32 %v1827, 0.0
    %v1845 = vadd.f32 %v1829, %v1224
    %v1846 = vadd.f32 %v1830, %v1225
    %v1847 = vadd.f32 %v1831, %v1226
    %v1848 = vadd.f32 %v1832, %v1227
    %v1849 = vadd.f32 %v1833, %v1228
    %v1850 = vadd.f32 %v1834, %v1229
    %v1851 = vadd.f32 %v1835, %v1230
    %v1852 = vadd.f32 %v1836, %v1231
    %v1853 = vadd.f32 %v1837, %v1232
    %v1854 = vadd.f32 %v1838, %v1233
    %v1855 = vadd.f32 %v1839, %v1234
    %v1856 = vadd.f32 %v1840, %v1235
    %v1857 = vadd.f32 %v1841, %v1236
    %v1858 = vadd.f32 %v1842, %v1237
    %v1859 = vadd.f32 %v1843, %v1238
    %v1860 = vadd.f32 %v1844, %v1239
    %v1861 = vld [vmem:[%s7] sm:$0xf]
    %v1862 = vld [vmem:[%s7 + $0x4] sm:$0xf]
    %v1863 = vld [vmem:[%s7 + $0x8] sm:$0xf]
    %v1864 = vld [vmem:[%s7 + $0xc] sm:$0xf]
    %v1865 = vld [vmem:[%s7 + $0x10] sm:$0xf]
    %v1866 = vld [vmem:[%s7 + $0x14] sm:$0xf]
    %v1867 = vld [vmem:[%s7 + $0x18] sm:$0xf]
    %v1868 = vld [vmem:[%s7 + $0x1c] sm:$0xf]
    %v1869 = vld [vmem:[%s7 + $0x20] sm:$0xf]
    %v1870 = vld [vmem:[%s7 + $0x24] sm:$0xf]
    %v1871 = vld [vmem:[%s7 + $0x28] sm:$0xf]
    %v1872 = vld [vmem:[%s7 + $0x2c] sm:$0xf]
    %v1873 = vld [vmem:[%s7 + $0x30] sm:$0xf]
    %v1874 = vld [vmem:[%s7 + $0x34] sm:$0xf]
    %v1875 = vld [vmem:[%s7 + $0x38] sm:$0xf]
    %v1876 = vld [vmem:[%s7 + $0x3c] sm:$0xf]
    %v1877 = vld [vmem:[%s7 + $0x40] sm:$0xf]
    %v1878 = vld [vmem:[%s7 + $0x44] sm:$0xf]
    %v1879 = vld [vmem:[%s7 + $0x48] sm:$0xf]
    %v1880 = vld [vmem:[%s7 + $0x4c] sm:$0xf]
    %v1881 = vld [vmem:[%s7 + $0x50] sm:$0xf]
    %v1882 = vld [vmem:[%s7 + $0x54] sm:$0xf]
    %v1883 = vld [vmem:[%s7 + $0x58] sm:$0xf]
    %v1884 = vld [vmem:[%s7 + $0x5c] sm:$0xf]
    %v1885 = vld [vmem:[%s7 + $0x60] sm:$0xf]
    %v1886 = vld [vmem:[%s7 + $0x64] sm:$0xf]
    %v1887 = vld [vmem:[%s7 + $0x68] sm:$0xf]
    %v1888 = vld [vmem:[%s7 + $0x6c] sm:$0xf]
    %v1889 = vld [vmem:[%s7 + $0x70] sm:$0xf]
    %v1890 = vld [vmem:[%s7 + $0x74] sm:$0xf]
    %v1891 = vld [vmem:[%s7 + $0x78] sm:$0xf]
    %v1892 = vld [vmem:[%s7 + $0x7c] sm:$0xf]
    %v1893 = vpack.c.bf16 %v1847, %v1845
    %v1894 = vpack.c.bf16 %v1848, %v1846
    %v1895 = vpack.c.bf16 %v1851, %v1849
    %v1896 = vpack.c.bf16 %v1852, %v1850
    %v1897 = vpack.c.bf16 %v1855, %v1853
    %v1898 = vpack.c.bf16 %v1856, %v1854
    %v1899 = vpack.c.bf16 %v1859, %v1857
    %v1900 = vpack.c.bf16 %v1860, %v1858
    %v1901 = vld [vmem:[%s8 + $0x3] ss:$0 sm:$0xff]
    %v1934 = vunpack.c.l.b16 %v1861
    %v1935 = vunpack.c.l.b16 %v1862
    %v1936 = vunpack.c.l.b16 %v1863
    %v1937 = vunpack.c.l.b16 %v1864
    %v1938 = vunpack.c.l.b16 %v1865
    %v1939 = vunpack.c.l.b16 %v1866
    %v1940 = vunpack.c.l.b16 %v1867
    %v1941 = vunpack.c.l.b16 %v1868
    %v1942 = vunpack.c.l.b16 %v1869
    %v1943 = vunpack.c.l.b16 %v1870
    %v1944 = vunpack.c.l.b16 %v1871
    %v1945 = vunpack.c.l.b16 %v1872
    %v1946 = vunpack.c.l.b16 %v1873
    %v1947 = vunpack.c.l.b16 %v1874
    %v1948 = vunpack.c.l.b16 %v1875
    %v1949 = vunpack.c.l.b16 %v1876
    %v1950 = vunpack.c.l.b16 %v1877
    %v1951 = vunpack.c.l.b16 %v1878
    %v1952 = vunpack.c.l.b16 %v1879
    %v1953 = vunpack.c.l.b16 %v1880
    %v1954 = vunpack.c.l.b16 %v1881
    %v1955 = vunpack.c.l.b16 %v1882
    %v1956 = vunpack.c.l.b16 %v1883
    %v1957 = vunpack.c.l.b16 %v1884
    %v1958 = vunpack.c.l.b16 %v1885
    %v1959 = vunpack.c.l.b16 %v1886
    %v1960 = vunpack.c.l.b16 %v1887
    %v1961 = vunpack.c.l.b16 %v1888
    %v1962 = vunpack.c.l.b16 %v1889
    %v1963 = vunpack.c.l.b16 %v1890
    %v1964 = vunpack.c.l.b16 %v1891
    %v1965 = vunpack.c.l.b16 %v1892
    %v1966 = vpack.c.b16 %v1935, %v1934
    %v1967 = vpack.c.b16 %v1937, %v1936
    %v1968 = vpack.c.b16 %v1939, %v1938
    %v1969 = vpack.c.b16 %v1941, %v1940
    %v1970 = vpack.c.b16 %v1943, %v1942
    %v1971 = vpack.c.b16 %v1945, %v1944
    %v1972 = vpack.c.b16 %v1947, %v1946
    %v1973 = vpack.c.b16 %v1949, %v1948
    %v1974 = vpack.c.b16 %v1951, %v1950
    %v1975 = vpack.c.b16 %v1953, %v1952
    %v1976 = vpack.c.b16 %v1955, %v1954
    %v1977 = vpack.c.b16 %v1957, %v1956
    %v1978 = vpack.c.b16 %v1959, %v1958
    %v1979 = vpack.c.b16 %v1961, %v1960
    %v1980 = vpack.c.b16 %v1963, %v1962
    %v1981 = vpack.c.b16 %v1965, %v1964
    %1998 = vmatprep.subr.bf16.mxu0 0
    %1999 = vmatpush1.bf16.msra.mxu0 %v1966
    %2000 = vmatprep.subr.bf16.mxu0 0
    %2001 = vmatpush1.bf16.msra.mxu0 %v1967
    %2002 = vmatprep.subr.bf16.mxu0 0
    %2003 = vmatpush1.bf16.msra.mxu0 %v1968
    %2004 = vmatprep.subr.bf16.mxu0 0
    %2005 = vmatpush1.bf16.msra.mxu0 %v1969
    %2006 = vmatprep.subr.bf16.mxu0 0
    %2007 = vmatpush1.bf16.msra.mxu0 %v1970
    %2008 = vmatprep.subr.bf16.mxu0 0
    %2009 = vmatpush1.bf16.msra.mxu0 %v1971
    %2010 = vmatprep.subr.bf16.mxu0 0
    %2011 = vmatpush1.bf16.msra.mxu0 %v1972
    %2012 = vmatprep.subr.bf16.mxu0 0
    %2013 = vmatpush1.bf16.msra.mxu0 %v1973
    %2014 = vmatprep.subr.bf16.mxu0 0
    %2015 = vmatpush1.bf16.msra.mxu0 %v1974
    %2016 = vmatprep.subr.bf16.mxu0 0
    %2017 = vmatpush1.bf16.msra.mxu0 %v1975
    %2018 = vmatprep.subr.bf16.mxu0 0
    %2019 = vmatpush1.bf16.msra.mxu0 %v1976
    %2020 = vmatprep.subr.bf16.mxu0 0
    %2021 = vmatpush1.bf16.msra.mxu0 %v1977
    %2022 = vmatprep.subr.bf16.mxu0 0
    %2023 = vmatpush1.bf16.msra.mxu0 %v1978
    %2024 = vmatprep.subr.bf16.mxu0 0
    %2025 = vmatpush1.bf16.msra.mxu0 %v1979
    %2026 = vmatprep.subr.bf16.mxu0 0
    %2027 = vmatpush1.bf16.msra.mxu0 %v1980
    %2028 = vmatprep.subr.bf16.mxu0 0
    %2029 = vmatpush1.bf16.msra.mxu0 %v1981
    %2030 = vmatprep.mubr.bf16.mxu0 %v1894
    %2031 = vmatmul.mubr.bf16.gmra.mrb[0].mxu0 %v1893
    %v2032 = vpop.f32.mrb[0].mxu0
    %v2033 = vadd.f32 %v1901, %v2032
    %v2034 = vpop.f32.mrb[0].mxu0
    %v2035 = vpop.f32.mrb[0].mxu0
    %v2036 = vadd.f32 %v1901, %v2035
    %v2037 = vpop.f32.mrb[0].mxu0
    %2038 = vmatprep.mubr.bf16.mxu0 %v1896
    %2039 = vmatmul.mubr.bf16.gmra.mrb[0].mxu0 %v1895
    %v2040 = vpop.f32.mrb[0].mxu0
    %v2041 = vadd.f32 %v1901, %v2040
    %v2042 = vpop.f32.mrb[0].mxu0
    %v2043 = vpop.f32.mrb[0].mxu0
    %v2044 = vadd.f32 %v1901, %v2043
    %v2045 = vpop.f32.mrb[0].mxu0
    %2046 = vmatprep.mubr.bf16.mxu0 %v1898
    %2047 = vmatmul.mubr.bf16.gmra.mrb[0].mxu0 %v1897
    %v2048 = vpop.f32.mrb[0].mxu0
    %v2049 = vadd.f32 %v1901, %v2048
    %v2050 = vpop.f32.mrb[0].mxu0
    %v2051 = vpop.f32.mrb[0].mxu0
    %v2052 = vadd.f32 %v1901, %v2051
    %v2053 = vpop.f32.mrb[0].mxu0
    %2054 = vmatprep.mubr.bf16.mxu0 %v1900
    %2055 = vmatmul.mubr.bf16.gmra.mrb[0].mxu0 %v1899
    %v2056 = vpop.f32.mrb[0].mxu0
    %v2057 = vadd.f32 %v1901, %v2056
    %v2058 = vpop.f32.mrb[0].mxu0
    %v2059 = vpop.f32.mrb[0].mxu0
    %v2060 = vadd.f32 %v1901, %v2059
    %v2061 = vpop.f32.mrb[0].mxu0
    %2062 = vdwg.mxu0
    %vm2063 = vcmask 7168
    %2064 = vst.msk [vmem:[%s10] sm:$0xff] %vm2063, %v2033
    %2065 = vst.msk [vmem:[%s10 + $0x8] sm:$0xff] %vm2063, %v2036
    %2066 = vst.msk [vmem:[%s10 + $0x10] sm:$0xff] %vm2063, %v2041
    %2067 = vst.msk [vmem:[%s10 + $0x18] sm:$0xff] %vm2063, %v2044
    %2068 = vst.msk [vmem:[%s10 + $0x20] sm:$0xff] %vm2063, %v2049
    %2069 = vst.msk [vmem:[%s10 + $0x28] sm:$0xff] %vm2063, %v2052
    %2070 = vst.msk [vmem:[%s10 + $0x30] sm:$0xff] %vm2063, %v2057
    %2071 = vst.msk [vmem:[%s10 + $0x38] sm:$0xff] %vm2063, %v2060
    // Predicated region
    $region46: #{tpu_custom_call.1} parent=1 // pred_check
      _
    $region47: #{tpu_custom_call.1} parent=1 // pred_check_branch
      %2073 = sbr.rel (0) target = $region49
    $region48: #{tpu_custom_call.1} parent=1 // pred_region
      _
    $region49: #{tpu_custom_call.1} parent=1 // pred_fallthru
      _
    // Predicated region
    $region50: #{tpu_custom_call.1} parent=1 // pred_check
      _
    $region51: #{tpu_custom_call.1} parent=1 // pred_check_branch
      %2075 = sbr.rel (0) target = $region53
    $region52: #{tpu_custom_call.1} parent=1 // pred_region
      _
    $region53: #{tpu_custom_call.1} parent=1 // pred_fallthru
      _
    // Predicated region
    $region54: #{tpu_custom_call.1} parent=1 // pred_check
      _
    $region55: #{tpu_custom_call.1} parent=1 // pred_check_branch
      %2077 = sbr.rel (0) target = $region57
    $region56: #{tpu_custom_call.1} parent=1 // pred_region
      _
    $region57: #{tpu_custom_call.1} parent=1 // pred_fallthru
      _
    // Predicated region
    $region58: #{tpu_custom_call.1} parent=1 // pred_check
      _
    $region59: #{tpu_custom_call.1} parent=1 // pred_check_branch
      %2079 = sbr.rel (0) target = $region61
    $region60: #{tpu_custom_call.1} parent=1 // pred_region
      _
    $region61: #{tpu_custom_call.1} parent=1 // pred_fallthru
      _
    %2080 = vsyncpa [#allocation4], 1
    %2081 = vsyncpa [#allocation6], 1

</llo_original>
